<compile_context>
chip_gen: v6e
topology: v6e:2x2x1
jax: 0.10.0
libtpu: 0.0.40
codegen_flags: <defaults>
</compile_context>

<pallas_src>
import functools

import jax
import jax.numpy as jnp
import numpy as np
from jax.experimental import pallas as pl
from jax.experimental.pallas import tpu as pltpu

_EPS = 1e-5
_LANE = 128


def _round_up(x, m):
    return (x + m - 1) // m * m


# --------------------------------------------------------------------------
# In-kernel helpers
# --------------------------------------------------------------------------

def _zero_halo(pad_ref, nt, h, w, cp):
    """Zero only the 1-pixel halo; the interior is fully rewritten each step."""
    zrow = jnp.zeros((nt, 1, w + 2, cp), jnp.float32)
    pad_ref[:, 0:1, :, :] = zrow
    pad_ref[:, h + 1:h + 2, :, :] = zrow
    zcol = jnp.zeros((nt, h + 2, 1, cp), jnp.float32)
    pad_ref[:, :, 0:1, :] = zcol
    pad_ref[:, :, w + 1:w + 2, :] = zcol


def _conv3x3_from_pad(pad_ref, w_ref, nt, h, w, cp):
    """3x3 conv (padding=1) from the zero-halo scratch as 3 MXU matmuls.

    pad_ref : (nt, h+2, w+2, cp) f32 scratch, interior = activation, halo = 0
    w_ref   : (3, 3*cp, cp) bf16, kw-grouped (rows ordered kh-major, cin-minor)
    returns : (nt*h*w, cp) f32
    """
    m = nt * h * w
    acc = jnp.zeros((m, cp), jnp.float32)
    for kw in range(3):
        # One sublane-realigning slice per kw group (W is the sublane axis),
        # cast to bf16 once; the 3 kh taps are cheap leading-dim slices.
        shifted = pad_ref[:, :, kw:kw + w, :].astype(jnp.bfloat16)  # (nt,h+2,w,cp)
        cols = jnp.concatenate([shifted[:, kh:kh + h] for kh in range(3)],
                               axis=-1).reshape(m, 3 * cp)          # bf16 slab
        acc = acc + jnp.dot(cols, w_ref[kw], preferred_element_type=jnp.float32)
    return acc


def _bn_scale_shift(s_ref, g_ref, be_ref, m_total):
    """Fold batch stats (sum, sumsq) + gamma/beta into y = z*a + b (f32)."""
    inv_m = jnp.float32(1.0 / m_total)
    mean = s_ref[0:1, :] * inv_m
    var = jnp.maximum(s_ref[1:2, :] * inv_m - mean * mean, 0.0)
    a = g_ref[...] * jax.lax.rsqrt(var + _EPS)
    b = be_ref[...] - mean * a
    return a, b


# --------------------------------------------------------------------------
# Pass 1: conv1 + batch stats of z1   (stats accumulated over the grid)
# --------------------------------------------------------------------------

def _conv1_stats_kernel(x_ref, w1_ref, z_ref, s_ref, pad_ref, *, nt, h, w, cp):
    @pl.when(pl.program_id(0) == 0)
    def _init():
        _zero_halo(pad_ref, nt, h, w, cp)
        s_ref[...] = jnp.zeros_like(s_ref)

    pad_ref[:, 1:h + 1, 1:w + 1, :] = x_ref[...]
    z = _conv3x3_from_pad(pad_ref, w1_ref, nt, h, w, cp)          # (m, cp) f32
    z_ref[...] = z.reshape(nt, h, w, cp)
    s_ref[...] += jnp.concatenate(
        [jnp.sum(z, axis=0, keepdims=True),
         jnp.sum(z * z, axis=0, keepdims=True)], axis=0)


# --------------------------------------------------------------------------
# Pass 2: bn1 -> relu -> conv2 + batch stats of z2
# --------------------------------------------------------------------------

def _bn1_conv2_stats_kernel(z1_ref, s1_ref, g1_ref, be1_ref, w2_ref,
                            z2_ref, s2_ref, pad_ref,
                            *, nt, h, w, cp, m_total):
    @pl.when(pl.program_id(0) == 0)
    def _init():
        _zero_halo(pad_ref, nt, h, w, cp)
        s2_ref[...] = jnp.zeros_like(s2_ref)

    a, b = _bn_scale_shift(s1_ref, g1_ref, be1_ref, m_total)
    y1 = jnp.maximum(z1_ref[...] * a.reshape(1, 1, 1, cp)
                     + b.reshape(1, 1, 1, cp), 0.0)
    # Write conv2's im2col input directly (no intermediate activation copy).
    pad_ref[:, 1:h + 1, 1:w + 1, :] = y1
    z2 = _conv3x3_from_pad(pad_ref, w2_ref, nt, h, w, cp)
    z2_ref[...] = z2.reshape(nt, h, w, cp)
    s2_ref[...] += jnp.concatenate(
        [jnp.sum(z2, axis=0, keepdims=True),
         jnp.sum(z2 * z2, axis=0, keepdims=True)], axis=0)


# --------------------------------------------------------------------------
# Pass 3: bn2 + shortcut (identity or 1x1 conv) + add + relu
# --------------------------------------------------------------------------

def _bn2_residual_kernel(z2_ref, s2_ref, g2_ref, be2_ref, x_ref, *rest,
                         nt, h, w, cp, m_total, use_1x1conv):
    if use_1x1conv:
        w3_ref, b3_ref, o_ref = rest
    else:
        (o_ref,) = rest

    a, b = _bn_scale_shift(s2_ref, g2_ref, be2_ref, m_total)
    y2 = z2_ref[...] * a.reshape(1, 1, 1, cp) + b.reshape(1, 1, 1, cp)

    if use_1x1conv:
        m = nt * h * w
        xs = jnp.dot(x_ref[...].reshape(m, cp).astype(jnp.bfloat16), w3_ref[...],
                     preferred_element_type=jnp.float32) + b3_ref[...]
        xs = xs.reshape(nt, h, w, cp)
    else:
        xs = x_ref[...]

    o_ref[...] = jnp.maximum(y2 + xs, 0.0)


# --------------------------------------------------------------------------
# Wrapper: tiled 3-pass pipeline on padded NHWC activations
# --------------------------------------------------------------------------

def _vmem_limit_bytes(nt, h, w, cp):
    """Rough per-step footprint estimate -> explicit scoped-VMEM limit."""
    act = nt * h * w * cp * 4
    pad = nt * (h + 2) * (w + 2) * cp * 4
    cols = nt * (h + 2) * w * cp * 2 + nt * h * w * 3 * cp * 2
    wgt = 9 * cp * cp * 2 + cp * cp * 2
    est = 2 * (2 * act) + pad + cols + wgt + act          # dbl-buffered I/O + temps
    return int(min(max(32 << 20, 2 * est), 48 << 20))      # headroom, v7x-safe cap


def _residual_pallas(x_pad, packed, use_1x1conv, batch_tile=1):
    n, h, w, cp = x_pad.shape
    nt = min(batch_tile, n)
    assert n % nt == 0, "batch_tile must divide the batch"
    grid = (n // nt,)
    m_total = n * h * w

    act_spec = pl.BlockSpec((nt, h, w, cp), lambda bidx: (bidx, 0, 0, 0))
    stat_spec = pl.BlockSpec((2, cp), lambda bidx: (0, 0))
    vec_spec = pl.BlockSpec((1, cp), lambda bidx: (0, 0))
    w3x3_spec = pl.BlockSpec((3, 3 * cp, cp), lambda bidx: (0, 0, 0))
    pad_scratch = pltpu.VMEM((nt, h + 2, w + 2, cp), jnp.float32)

    vmem_limit = _vmem_limit_bytes(nt, h, w, cp)
    params_acc = pltpu.CompilerParams(dimension_semantics=("arbitrary",),
                                      vmem_limit_bytes=vmem_limit)
    params_par = pltpu.CompilerParams(dimension_semantics=("parallel",),
                                      vmem_limit_bytes=vmem_limit)

    # Pass 1: conv1 + stats(z1)
    z1, s1 = pl.pallas_call(
        functools.partial(_conv1_stats_kernel, nt=nt, h=h, w=w, cp=cp),
        grid=grid,
        in_specs=[act_spec, w3x3_spec],
        out_specs=[act_spec, stat_spec],
        out_shape=[jax.ShapeDtypeStruct((n, h, w, cp), jnp.float32),
                   jax.ShapeDtypeStruct((2, cp), jnp.float32)],
        scratch_shapes=[pad_scratch],
        compiler_params=params_acc,
    )(x_pad, packed["w1"])

    # Pass 2: bn1 -> relu -> conv2 + stats(z2)
    z2, s2 = pl.pallas_call(
        functools.partial(_bn1_conv2_stats_kernel, nt=nt, h=h, w=w, cp=cp,
                          m_total=m_total),
        grid=grid,
        in_specs=[act_spec, stat_spec, vec_spec, vec_spec, w3x3_spec],
        out_specs=[act_spec, stat_spec],
        out_shape=[jax.ShapeDtypeStruct((n, h, w, cp), jnp.float32),
                   jax.ShapeDtypeStruct((2, cp), jnp.float32)],
        scratch_shapes=[pad_scratch],
        compiler_params=params_acc,
    )(z1, s1, packed["g1"], packed["be1"], packed["w2"])

    # Pass 3: bn2 + shortcut + add + relu
    ins = [z2, s2, packed["g2"], packed["be2"], x_pad]
    in_specs = [act_spec, stat_spec, vec_spec, vec_spec, act_spec]
    if use_1x1conv:
        ins += [packed["w3"], packed["b3"]]
        in_specs += [pl.BlockSpec((cp, cp), lambda bidx: (0, 0)), vec_spec]

    out = pl.pallas_call(
        functools.partial(_bn2_residual_kernel, nt=nt, h=h, w=w, cp=cp,
                          m_total=m_total, use_1x1conv=use_1x1conv),
        grid=grid,
        in_specs=in_specs,
        out_specs=act_spec,
        out_shape=jax.ShapeDtypeStruct((n, h, w, cp), jnp.float32),
        compiler_params=params_par,
    )(*ins)
    return out


# --------------------------------------------------------------------------
# One-time parameter packing (layout plumbing stays out of the hot path)
# --------------------------------------------------------------------------

def pack_residual_params(params, cin, cout, use_1x1conv):
    cp = _round_up(max(cin, cout), _LANE)

    def pad_w3x3(wgt):                      # (3,3,Ci,Co) -> (3, 3*Cp, Cp) bf16
        ci, co = wgt.shape[2], wgt.shape[3]
        wp = jnp.zeros((3, 3, cp, cp), jnp.float32).at[:, :, :ci, :co].set(wgt)
        # kw-grouped: group kw holds rows [kh=0 | kh=1 | kh=2] x cin.
        return jnp.transpose(wp, (1, 0, 2, 3)).reshape(3, 3 * cp, cp).astype(jnp.bfloat16)

    def pad_vec(v):                         # (Co,) -> (1, Cp) f32
        return jnp.zeros((1, cp), jnp.float32).at[0, :v.shape[0]].set(v)

    packed = {
        "cp": cp,
        "w1": pad_w3x3(params["w1"]),
        "g1": pad_vec(params["g1"]), "be1": pad_vec(params["be1"]),
        "w2": pad_w3x3(params["w2"]),
        "g2": pad_vec(params["g2"]), "be2": pad_vec(params["be2"]),
    }
    # NOTE: conv biases b1/b2 are intentionally NOT packed: a per-channel
    # constant added before training-mode BatchNorm is exactly cancelled by the
    # mean subtraction, so the kernel skips those adds.
    if use_1x1conv:
        w3 = params["w3"]                   # (Ci, Co)
        w3p = jnp.zeros((cp, cp), jnp.float32).at[:w3.shape[0], :w3.shape[1]].set(w3)
        packed["w3"] = w3p.astype(jnp.bfloat16)
        packed["b3"] = pad_vec(params["b3"])
    return packed


def residual_forward(x_nchw, packed, cout, use_1x1conv, stride=1, batch_tile=1):
    if stride != 1:
        # TODO(synk): stride > 1 needs a strided im2col gather; not implemented.
        raise NotImplementedError("stride > 1 not implemented")
    n, cin, h, w = x_nchw.shape
    cp = packed["cp"]
    # Boundary-only layout conversion; a full network would keep activations in
    # padded NHWC (N, H, W, Cp) between blocks and skip these transposes.
    x = jnp.transpose(x_nchw, (0, 2, 3, 1))
    x = jnp.pad(x, ((0, 0), (0, 0), (0, 0), (0, cp - cin)))
    y = _residual_pallas(x, packed, use_1x1conv, batch_tile=batch_tile)
    return jnp.transpose(y[..., :cout], (0, 3, 1, 2))


# --------------------------------------------------------------------------
# Pure-JAX reference (same precision policy: bf16 MXU operands, f32 math)
# --------------------------------------------------------------------------

def residual_reference(x_nchw, params, use_1x1conv):
    n, cin, h, w = x_nchw.shape
    x = jnp.transpose(x_nchw, (0, 2, 3, 1)).astype(jnp.float32)

    def conv3x3(a, wgt, b):
        z = jax.lax.conv_general_dilated(
            a.astype(jnp.bfloat16), wgt.astype(jnp.bfloat16),
            window_strides=(1, 1), padding="SAME",
            dimension_numbers=("NHWC", "HWIO", "NHWC"),
            preferred_element_type=jnp.float32)
        return z + b.reshape(1, 1, 1, -1)

    def batchnorm(z, g, be):
        mean = jnp.mean(z, axis=(0, 1, 2), keepdims=True)
        var = jnp.mean(jnp.square(z - mean), axis=(0, 1, 2), keepdims=True)
        return ((z - mean) * jax.lax.rsqrt(var + _EPS) * g.reshape(1, 1, 1, -1)
                + be.reshape(1, 1, 1, -1))

    y = jnp.maximum(batchnorm(conv3x3(x, params["w1"], params["b1"]),
                              params["g1"], params["be1"]), 0.0)
    y = batchnorm(conv3x3(y, params["w2"], params["b2"]),
                  params["g2"], params["be2"])
    if use_1x1conv:
        cout = params["w3"].shape[1]
        xs = jnp.dot(x.reshape(n * h * w, cin).astype(jnp.bfloat16),
                     params["w3"].astype(jnp.bfloat16),
                     preferred_element_type=jnp.float32).reshape(n, h, w, cout)
        xs = xs + params["b3"].reshape(1, 1, 1, -1)
    else:
        xs = x
    return jnp.transpose(jnp.maximum(y + xs, 0.0), (0, 3, 1, 2))


def make_params(key, in_channels, num_channels, use_1x1conv):
    k1, k2, k3, kb1, kb2, kb3 = jax.random.split(key, 6)
    params = {
        "w1": 0.1 * jax.random.normal(k1, (3, 3, in_channels, num_channels), jnp.float32),
        "b1": 0.1 * jax.random.normal(kb1, (num_channels,), jnp.float32),
        "g1": jnp.ones((num_channels,), jnp.float32),
        "be1": jnp.zeros((num_channels,), jnp.float32),
        "w2": 0.1 * jax.random.normal(k2, (3, 3, num_channels, num_channels), jnp.float32),
        "b2": 0.1 * jax.random.normal(kb2, (num_channels,), jnp.float32),
        "g2": jnp.ones((num_channels,), jnp.float32),
        "be2": jnp.zeros((num_channels,), jnp.float32),
    }
    if use_1x1conv:
        params["w3"] = 0.1 * jax.random.normal(k3, (in_channels, num_channels), jnp.float32)
        params["b3"] = 0.1 * jax.random.normal(kb3, (num_channels,), jnp.float32)
    return params


if __name__ == "__main__":
    key = jax.random.PRNGKey(0)
    kx1, kx2, kp1, kp2 = jax.random.split(key, 4)

    # Config 1: projection shortcut (use_1x1conv=True), Cin != Cout.
    N, Cin, H, W = 2, 4, 16, 16
    Cout = 8
    x1 = jax.random.normal(kx1, (N, Cin, H, W), jnp.float32)
    p1 = make_params(kp1, Cin, Cout, use_1x1conv=True)
    packed1 = pack_residual_params(p1, Cin, Cout, use_1x1conv=True)
    out1 = jax.block_until_ready(
        residual_forward(x1, packed1, Cout, use_1x1conv=True, batch_tile=1))
    assert out1.shape == (N, Cout, H, W)
    ref1 = residual_reference(x1, p1, use_1x1conv=True)
    np.testing.assert_allclose(np.asarray(out1), np.asarray(ref1), rtol=2e-3, atol=2e-3)

    # Config 2: identity shortcut (use_1x1conv=False), Cin == Cout.
    x2 = jax.random.normal(kx2, (N, Cout, H, W), jnp.float32)
    p2 = make_params(kp2, Cout, Cout, use_1x1conv=False)
    packed2 = pack_residual_params(p2, Cout, Cout, use_1x1conv=False)
    out2 = jax.block_until_ready(
        residual_forward(x2, packed2, Cout, use_1x1conv=False, batch_tile=1))
    assert out2.shape == (N, Cout, H, W)
    ref2 = residual_reference(x2, p2, use_1x1conv=False)
    np.testing.assert_allclose(np.asarray(out2), np.asarray(ref2), rtol=2e-3, atol=2e-3)

    print("KERNEL_OK")
</pallas_src>

<mosaic_0001>
module attributes {stable_mosaic.version = 11 : i64} {
  func.func @_conv1_stats_kernel(%arg0: i32, %arg1: memref<1x16x16x128xf32, #tpu.memory_space<vmem>>, %arg2: memref<3x384x128xbf16, #tpu.memory_space<vmem>>, %arg3: memref<1x16x16x128xf32, #tpu.memory_space<vmem>>, %arg4: memref<2x128xf32, #tpu.memory_space<vmem>>, %arg5: memref<1x18x18x128xf32, #tpu.memory_space<vmem>>) attributes {dimension_semantics = [#tpu.dimension_semantics<arbitrary>], iteration_bounds = array<i64: 2>, scalar_prefetch = 0 : i64, scratch_operands = 1 : i64, tpu.core_type = #tpu.core_type<tc>, window_params = [{transform_indices = @transform_0, window_bounds = array<i64: 1, 16, 16, 128>}, {pipeline_mode = #tpu.pipeline_mode<synchronous>, transform_indices = @transform_1, window_bounds = array<i64: 3, 384, 128>}, {transform_indices = @transform_2, window_bounds = array<i64: 1, 16, 16, 128>}, {pipeline_mode = #tpu.pipeline_mode<synchronous>, transform_indices = @transform_3, window_bounds = array<i64: 2, 128>}]} {
    %c0_i32 = arith.constant 0 : i32
    %0 = arith.cmpi eq, %arg0, %c0_i32 : i32
    %1 = arith.extui %0 : i1 to i32
    %c0_i32_0 = arith.constant 0 : i32
    %2 = arith.cmpi ne, %1, %c0_i32_0 : i32
    scf.if %2 {
      %cst_40 = arith.constant 0.000000e+00 : f32
      %50 = vector.broadcast %cst_40 : f32 to vector<1x1x18x128xf32>
      %c0_41 = arith.constant 0 : index
      %c0_42 = arith.constant 0 : index
      %c0_43 = arith.constant 0 : index
      %c0_44 = arith.constant 0 : index
      %51 = vector.load %arg5[%c0_41, %c0_42, %c0_43, %c0_44] : memref<1x18x18x128xf32, #tpu.memory_space<vmem>>, vector<1x1x18x128xf32>
      tpu.vector_store %arg5[%c0_41, %c0_42, %c0_43, %c0_44], %50 {strides = array<i32>} : memref<1x18x18x128xf32, #tpu.memory_space<vmem>>, vector<1x1x18x128xf32>,
      %c0_45 = arith.constant 0 : index
      %c17 = arith.constant 17 : index
      %c0_46 = arith.constant 0 : index
      %c0_47 = arith.constant 0 : index
      %52 = vector.load %arg5[%c0_45, %c17, %c0_46, %c0_47] : memref<1x18x18x128xf32, #tpu.memory_space<vmem>>, vector<1x1x18x128xf32>
      tpu.vector_store %arg5[%c0_45, %c17, %c0_46, %c0_47], %50 {strides = array<i32>} : memref<1x18x18x128xf32, #tpu.memory_space<vmem>>, vector<1x1x18x128xf32>,
      %cst_48 = arith.constant 0.000000e+00 : f32
      %53 = vector.broadcast %cst_48 : f32 to vector<1x18x1x128xf32>
      %c0_49 = arith.constant 0 : index
      %c0_50 = arith.constant 0 : index
      %c0_51 = arith.constant 0 : index
      %c0_52 = arith.constant 0 : index
      %54 = vector.load %arg5[%c0_49, %c0_50, %c0_51, %c0_52] : memref<1x18x18x128xf32, #tpu.memory_space<vmem>>, vector<1x18x1x128xf32>
      tpu.vector_store %arg5[%c0_49, %c0_50, %c0_51, %c0_52], %53 {strides = array<i32>} : memref<1x18x18x128xf32, #tpu.memory_space<vmem>>, vector<1x18x1x128xf32>,
      %c0_53 = arith.constant 0 : index
      %c0_54 = arith.constant 0 : index
      %c17_55 = arith.constant 17 : index
      %c0_56 = arith.constant 0 : index
      %55 = vector.load %arg5[%c0_53, %c0_54, %c17_55, %c0_56] : memref<1x18x18x128xf32, #tpu.memory_space<vmem>>, vector<1x18x1x128xf32>
      tpu.vector_store %arg5[%c0_53, %c0_54, %c17_55, %c0_56], %53 {strides = array<i32>} : memref<1x18x18x128xf32, #tpu.memory_space<vmem>>, vector<1x18x1x128xf32>,
      %cst_57 = arith.constant 0.000000e+00 : f32
      %56 = vector.broadcast %cst_57 : f32 to vector<2x128xf32>
      %c0_58 = arith.constant 0 : index
      %c0_59 = arith.constant 0 : index
      %57 = vector.load %arg4[%c0_58, %c0_59] : memref<2x128xf32, #tpu.memory_space<vmem>>, vector<2x128xf32>
      tpu.vector_store %arg4[%c0_58, %c0_59], %56 {strides = array<i32>} : memref<2x128xf32, #tpu.memory_space<vmem>>, vector<2x128xf32>,
    } else {
    }
    %c0 = arith.constant 0 : index
    %c0_1 = arith.constant 0 : index
    %c0_2 = arith.constant 0 : index
    %c0_3 = arith.constant 0 : index
    %3 = vector.load %arg1[%c0, %c0_1, %c0_2, %c0_3] : memref<1x16x16x128xf32, #tpu.memory_space<vmem>>, vector<1x16x16x128xf32>
    %c0_4 = arith.constant 0 : index
    %c1 = arith.constant 1 : index
    %c1_5 = arith.constant 1 : index
    %c0_6 = arith.constant 0 : index
    %4 = vector.load %arg5[%c0_4, %c1, %c1_5, %c0_6] : memref<1x18x18x128xf32, #tpu.memory_space<vmem>>, vector<1x16x16x128xf32>
    tpu.vector_store %arg5[%c0_4, %c1, %c1_5, %c0_6], %3 {strides = array<i32>} : memref<1x18x18x128xf32, #tpu.memory_space<vmem>>, vector<1x16x16x128xf32>,
    %cst = arith.constant 0.000000e+00 : f32
    %5 = vector.broadcast %cst : f32 to vector<256x128xf32>
    %c0_7 = arith.constant 0 : index
    %c0_8 = arith.constant 0 : index
    %c0_9 = arith.constant 0 : index
    %c0_10 = arith.constant 0 : index
    %6 = vector.load %arg5[%c0_7, %c0_8, %c0_9, %c0_10] : memref<1x18x18x128xf32, #tpu.memory_space<vmem>>, vector<1x18x16x128xf32>
    %7 = arith.truncf %6 : vector<1x18x16x128xf32> to vector<1x18x16x128xbf16>
    %8 = vector.extract_strided_slice %7 {offsets = [0, 0, 0, 0], sizes = [1, 16, 16, 128], strides = [1, 1, 1, 1]} : vector<1x18x16x128xbf16> to vector<1x16x16x128xbf16>
    %9 = vector.extract_strided_slice %7 {offsets = [0, 1, 0, 0], sizes = [1, 16, 16, 128], strides = [1, 1, 1, 1]} : vector<1x18x16x128xbf16> to vector<1x16x16x128xbf16>
    %10 = vector.extract_strided_slice %7 {offsets = [0, 2, 0, 0], sizes = [1, 16, 16, 128], strides = [1, 1, 1, 1]} : vector<1x18x16x128xbf16> to vector<1x16x16x128xbf16>
    %11 = tpu.concatenate %8, %9, %10 in 3 : vector<1x16x16x128xbf16>, vector<1x16x16x128xbf16>, vector<1x16x16x128xbf16> -> vector<1x16x16x384xbf16>
    %12 = vector.shape_cast %11 : vector<1x16x16x384xbf16> to vector<256x384xbf16>
    %c0_11 = arith.constant 0 : index
    %c0_12 = arith.constant 0 : index
    %c0_13 = arith.constant 0 : index
    %13 = vector.load %arg2[%c0_11, %c0_12, %c0_13] : memref<3x384x128xbf16, #tpu.memory_space<vmem>>, vector<1x384x128xbf16>
    %14 = vector.shape_cast %13 : vector<1x384x128xbf16> to vector<384x128xbf16>
    %cst_14 = arith.constant dense<0.000000e+00> : vector<256x128xf32>
    %15 = tpu.matmul %12, %14, %cst_14 {dimension_numbers = #tpu.dot_dimension_numbers<[1], [0], [0], [1], [0, 0, 1, 1], [], []>} : vector<256x384xbf16>, vector<384x128xbf16>, vector<256x128xf32> -> vector<256x128xf32>
    %16 = arith.addf %5, %15 : vector<256x128xf32>
    %c0_15 = arith.constant 0 : index
    %c0_16 = arith.constant 0 : index
    %c1_17 = arith.constant 1 : index
    %c0_18 = arith.constant 0 : index
    %17 = vector.load %arg5[%c0_15, %c0_16, %c1_17, %c0_18] : memref<1x18x18x128xf32, #tpu.memory_space<vmem>>, vector<1x18x16x128xf32>
    %18 = arith.truncf %17 : vector<1x18x16x128xf32> to vector<1x18x16x128xbf16>
    %19 = vector.extract_strided_slice %18 {offsets = [0, 0, 0, 0], sizes = [1, 16, 16, 128], strides = [1, 1, 1, 1]} : vector<1x18x16x128xbf16> to vector<1x16x16x128xbf16>
    %20 = vector.extract_strided_slice %18 {offsets = [0, 1, 0, 0], sizes = [1, 16, 16, 128], strides = [1, 1, 1, 1]} : vector<1x18x16x128xbf16> to vector<1x16x16x128xbf16>
    %21 = vector.extract_strided_slice %18 {offsets = [0, 2, 0, 0], sizes = [1, 16, 16, 128], strides = [1, 1, 1, 1]} : vector<1x18x16x128xbf16> to vector<1x16x16x128xbf16>
    %22 = tpu.concatenate %19, %20, %21 in 3 : vector<1x16x16x128xbf16>, vector<1x16x16x128xbf16>, vector<1x16x16x128xbf16> -> vector<1x16x16x384xbf16>
    %23 = vector.shape_cast %22 : vector<1x16x16x384xbf16> to vector<256x384xbf16>
    %c1_19 = arith.constant 1 : index
    %c0_20 = arith.constant 0 : index
    %c0_21 = arith.constant 0 : index
    %24 = vector.load %arg2[%c1_19, %c0_20, %c0_21] : memref<3x384x128xbf16, #tpu.memory_space<vmem>>, vector<1x384x128xbf16>
    %25 = vector.shape_cast %24 : vector<1x384x128xbf16> to vector<384x128xbf16>
    %cst_22 = arith.constant dense<0.000000e+00> : vector<256x128xf32>
    %26 = tpu.matmul %23, %25, %cst_22 {dimension_numbers = #tpu.dot_dimension_numbers<[1], [0], [0], [1], [0, 0, 1, 1], [], []>} : vector<256x384xbf16>, vector<384x128xbf16>, vector<256x128xf32> -> vector<256x128xf32>
    %27 = arith.addf %16, %26 : vector<256x128xf32>
    %c0_23 = arith.constant 0 : index
    %c0_24 = arith.constant 0 : index
    %c2 = arith.constant 2 : index
    %c0_25 = arith.constant 0 : index
    %28 = vector.load %arg5[%c0_23, %c0_24, %c2, %c0_25] : memref<1x18x18x128xf32, #tpu.memory_space<vmem>>, vector<1x18x16x128xf32>
    %29 = arith.truncf %28 : vector<1x18x16x128xf32> to vector<1x18x16x128xbf16>
    %30 = vector.extract_strided_slice %29 {offsets = [0, 0, 0, 0], sizes = [1, 16, 16, 128], strides = [1, 1, 1, 1]} : vector<1x18x16x128xbf16> to vector<1x16x16x128xbf16>
    %31 = vector.extract_strided_slice %29 {offsets = [0, 1, 0, 0], sizes = [1, 16, 16, 128], strides = [1, 1, 1, 1]} : vector<1x18x16x128xbf16> to vector<1x16x16x128xbf16>
    %32 = vector.extract_strided_slice %29 {offsets = [0, 2, 0, 0], sizes = [1, 16, 16, 128], strides = [1, 1, 1, 1]} : vector<1x18x16x128xbf16> to vector<1x16x16x128xbf16>
    %33 = tpu.concatenate %30, %31, %32 in 3 : vector<1x16x16x128xbf16>, vector<1x16x16x128xbf16>, vector<1x16x16x128xbf16> -> vector<1x16x16x384xbf16>
    %34 = vector.shape_cast %33 : vector<1x16x16x384xbf16> to vector<256x384xbf16>
    %c2_26 = arith.constant 2 : index
    %c0_27 = arith.constant 0 : index
    %c0_28 = arith.constant 0 : index
    %35 = vector.load %arg2[%c2_26, %c0_27, %c0_28] : memref<3x384x128xbf16, #tpu.memory_space<vmem>>, vector<1x384x128xbf16>
    %36 = vector.shape_cast %35 : vector<1x384x128xbf16> to vector<384x128xbf16>
    %cst_29 = arith.constant dense<0.000000e+00> : vector<256x128xf32>
    %37 = tpu.matmul %34, %36, %cst_29 {dimension_numbers = #tpu.dot_dimension_numbers<[1], [0], [0], [1], [0, 0, 1, 1], [], []>} : vector<256x384xbf16>, vector<384x128xbf16>, vector<256x128xf32> -> vector<256x128xf32>
    %38 = arith.addf %27, %37 : vector<256x128xf32>
    %39 = vector.shape_cast %38 : vector<256x128xf32> to vector<1x16x16x128xf32>
    %c0_30 = arith.constant 0 : index
    %c0_31 = arith.constant 0 : index
    %c0_32 = arith.constant 0 : index
    %c0_33 = arith.constant 0 : index
    %40 = vector.load %arg3[%c0_30, %c0_31, %c0_32, %c0_33] : memref<1x16x16x128xf32, #tpu.memory_space<vmem>>, vector<1x16x16x128xf32>
    tpu.vector_store %arg3[%c0_30, %c0_31, %c0_32, %c0_33], %39 {strides = array<i32>} : memref<1x16x16x128xf32, #tpu.memory_space<vmem>>, vector<1x16x16x128xf32>,
    %c0_34 = arith.constant 0 : index
    %c0_35 = arith.constant 0 : index
    %41 = vector.load %arg4[%c0_34, %c0_35] : memref<2x128xf32, #tpu.memory_space<vmem>>, vector<2x128xf32>
    %cst_36 = arith.constant dense<0.000000e+00> : vector<128xf32>
    %42 = vector.multi_reduction <add>, %38, %cst_36 [0] : vector<256x128xf32> to vector<128xf32>
    %43 = vector.shape_cast %42 : vector<128xf32> to vector<1x128xf32>
    %44 = arith.mulf %38, %38 : vector<256x128xf32>
    %cst_37 = arith.constant dense<0.000000e+00> : vector<128xf32>
    %45 = vector.multi_reduction <add>, %44, %cst_37 [0] : vector<256x128xf32> to vector<128xf32>
    %46 = vector.shape_cast %45 : vector<128xf32> to vector<1x128xf32>
    %47 = tpu.concatenate %43, %46 in 0 : vector<1x128xf32>, vector<1x128xf32> -> vector<2x128xf32>
    %48 = arith.addf %41, %47 : vector<2x128xf32>
    %c0_38 = arith.constant 0 : index
    %c0_39 = arith.constant 0 : index
    %49 = vector.load %arg4[%c0_38, %c0_39] : memref<2x128xf32, #tpu.memory_space<vmem>>, vector<2x128xf32>
    tpu.vector_store %arg4[%c0_38, %c0_39], %48 {strides = array<i32>} : memref<2x128xf32, #tpu.memory_space<vmem>>, vector<2x128xf32>,
    return
  }
  func.func @transform_0(%arg0: i32) -> (i32, i32, i32, i32) {
    %c0_i32 = arith.constant 0 : i32
    %c0_i32_0 = arith.constant 0 : i32
    %c0_i32_1 = arith.constant 0 : i32
    %c0_i32_2 = arith.constant 0 : i32
    return %arg0, %c0_i32, %c0_i32_0, %c0_i32_1 : i32, i32, i32, i32
  }
  func.func @transform_1(%arg0: i32) -> (i32, i32, i32) {
    %c0_i32 = arith.constant 0 : i32
    %c0_i32_0 = arith.constant 0 : i32
    %c0_i32_1 = arith.constant 0 : i32
    %c0_i32_2 = arith.constant 0 : i32
    return %c0_i32, %c0_i32_0, %c0_i32_1 : i32, i32, i32
  }
  func.func @transform_2(%arg0: i32) -> (i32, i32, i32, i32) {
    %c0_i32 = arith.constant 0 : i32
    %c0_i32_0 = arith.constant 0 : i32
    %c0_i32_1 = arith.constant 0 : i32
    %c0_i32_2 = arith.constant 0 : i32
    return %arg0, %c0_i32, %c0_i32_0, %c0_i32_1 : i32, i32, i32, i32
  }
  func.func @transform_3(%arg0: i32) -> (i32, i32) {
    %c0_i32 = arith.constant 0 : i32
    %c0_i32_0 = arith.constant 0 : i32
    %c0_i32_1 = arith.constant 0 : i32
    return %c0_i32, %c0_i32_0 : i32, i32
  }
}

</mosaic_0001>

<llo_original>
// kernel: tpu_custom_call.1
$region0: #{tpu_custom_call.1}
  #allocation0 [shape = 'u32[]', space=smem, size = 0x4, offset = 0x4, fixed_abs, tag = 'smem constant byte address 0x4 - core index']
  #allocation1 [shape = 'u32[144,128]{1,0:T(1,128)}', space=vmem, size = 0x12000, scoped, tag = 'internal scratch']
  #allocation2 [shape = 'f32[1,18,18,128]{3,2,1,0:T(8,128)}', space=vmem, size = 0x36000, scoped, tag = 'scratch operand']
  %s0 = inlined_call_operand.hbm [shape: f32[2,16,16,128], index: 0, kind: input, shape index: {}]
  %s1 = inlined_call_operand.hbm [shape: bf16[3,384,128], index: 1, kind: input, shape index: {}]
  %s2 = inlined_call_operand.hbm [shape: f32[2,16,16,128], index: 2, kind: output, shape index: {0}]
  %s3 = inlined_call_operand.hbm [shape: f32[2,128], index: 3, kind: output, shape index: {1}]
  %4 = xla_tuple %s2, %s3
  %s5 = sld [smem:[#allocation0]]
  $region61: #{tpu_custom_call.1} parent=0
    _
  %s7 = ssub.s32 1, %s5
  %s8 = scalar_select 0, %s7, %s5
  $region1: #{tpu_custom_call.1} parent=0
    #allocation3 [shape = 'u8[262144]{0}', space=vmem, size = 0x40000, scoped, tag = 'input window, operand 0']
    #allocation4 [shape = 's32[2]{0}', space=sflag, size = 0x8, scoped, tag = 'scoped memory for tpu_custom_call.1']
    #allocation5 [shape = 's32[2]{0}', space=sflag, size = 0x8, scoped, tag = 'scoped memory for tpu_custom_call.1']
    #allocation6 [shape = 'u8[294912]{0}', space=vmem, size = 0x48000, scoped, tag = 'input window, operand 1, single buffered']
    #allocation7 [shape = 's32[1]{0}', space=sflag, size = 0x4, scoped, tag = 'scoped memory for tpu_custom_call.1']
    #allocation8 [shape = 'u8[262144]{0}', space=vmem, size = 0x40000, scoped, tag = 'output window, operand 0']
    #allocation9 [shape = 'u8[1024]{0}', space=vmem, size = 0x400, scoped, tag = 'output window, operand 1, single buffered']
    #allocation10 [shape = 's32[1]{0}', space=sflag, size = 0x4, scoped, tag = 'scoped memory for tpu_custom_call.1']
    %9 = vsyncpa [#allocation4], 0
    %s10 = scalar_lea.sflag [#allocation4], 1
    %11 = vsyncpa %s10, 0
    %12 = vsyncpa [#allocation7], 0
    %13 = vsyncpa [#allocation5], 0
    %s14 = scalar_lea.sflag [#allocation5], 1
    %15 = vsyncpa %s14, 0
    %16 = vsyncpa [#allocation10], 0
    loop: start=0, step=1, limit=4
    $region2: #{tpu_custom_call.1} parent=1 // loop_pre_header
      _
    $region3: #{tpu_custom_call.1} parent=1 // loop_header
      %s18 = sphi 0, %s22
      %p19 = scmp.ge.s32.totalorder %s18, 4
      %s28 = sphi 0, %s30
      %s31 = sphi 0, %s28
      %s32 = sphi 0, %s31
      %s48 = sphi 0, %s32
      %s52 = sphi 0, %s52
      %s54 = sphi 0, %s52
      %s55 = sphi 0, %s54
      %s69 = sphi 0, %s55
      %s75 = sphi 0, %s77
      %s78 = sphi 0, %s75
      %s79 = sphi 0, %s78
      %s95 = sphi 0, %s79
      %s99 = sphi 0, %s99
      %s101 = sphi 0, %s99
      %s102 = sphi 0, %s101
      %s116 = sphi 0, %s102
    $region4: #{tpu_custom_call.1} parent=1 // loop_header_branch
      %21 = sbr.rel (%p19) target = $region8
    $region5: #{tpu_custom_call.1} parent=1 // loop_body
      %s23 = ssub.s32 %s18, 1
      %s24 = ssub.s32 %s18, 2
      %s25 = sadd.s32 %s18, 1
      %s26 = ssub.s32 %s18, %s25
      %p27 = scmp.eq.s32.totalorder %s26, 0
      %s29 = sadd.s32 %s28, 1
      %s30 = scalar_select %p27, %s28, %s29
      %p33 = pneg %p27
      %p34 = scmp.eq.s32.totalorder %s18, 1
      %p35 = por %p33, %p34
      %p36 = scmp.ne.s32.totalorder %s28, %s31
      %p37 = scmp.eq.s32.totalorder %s18, 0
      %p38 = por %p36, %p37
      %p39 = scmp.ne.s32.totalorder %s28, %s31
      %p40 = scmp.eq.s32.totalorder %s23, 1
      %p41 = por %p39, %p40
      %p42 = scmp.ne.s32.totalorder %s31, %s32
      %p43 = scmp.eq.s32.totalorder %s23, 0
      %p44 = por %p42, %p43
      %p45 = scmp.ne.s32.totalorder %s31, %s32
      %p46 = scmp.eq.s32.totalorder %s24, 1
      %p47 = por %p45, %p46
      %p49 = scmp.ne.s32.totalorder %s32, %s48
      %p50 = scmp.eq.s32.totalorder %s24, 0
      %p51 = por %p49, %p50
      %s53 = sadd.s32 %s52, 1
      %p56 = scmp.eq.s32.totalorder %s18, 1
      %p57 = scmp.ne.s32.totalorder %s52, %s54
      %p58 = scmp.eq.s32.totalorder %s18, 0
      %p59 = por %p57, %p58
      %p60 = scmp.ne.s32.totalorder %s52, %s54
      %p61 = scmp.eq.s32.totalorder %s23, 1
      %p62 = por %p60, %p61
      %p63 = scmp.ne.s32.totalorder %s54, %s55
      %p64 = scmp.eq.s32.totalorder %s23, 0
      %p65 = por %p63, %p64
      %p66 = scmp.ne.s32.totalorder %s54, %s55
      %p67 = scmp.eq.s32.totalorder %s24, 1
      %p68 = por %p66, %p67
      %p70 = scmp.ne.s32.totalorder %s55, %s69
      %p71 = scmp.eq.s32.totalorder %s24, 0
      %p72 = por %p70, %p71
      %s73 = ssub.s32 %s18, %s25
      %p74 = scmp.eq.s32.totalorder %s73, 0
      %s76 = sadd.s32 %s75, 1
      %s77 = scalar_select %p74, %s75, %s76
      %p80 = pneg %p74
      %p81 = scmp.eq.s32.totalorder %s18, 1
      %p82 = por %p80, %p81
      %p83 = scmp.ne.s32.totalorder %s75, %s78
      %p84 = scmp.eq.s32.totalorder %s18, 0
      %p85 = por %p83, %p84
      %p86 = scmp.ne.s32.totalorder %s75, %s78
      %p87 = scmp.eq.s32.totalorder %s23, 1
      %p88 = por %p86, %p87
      %p89 = scmp.ne.s32.totalorder %s78, %s79
      %p90 = scmp.eq.s32.totalorder %s23, 0
      %p91 = por %p89, %p90
      %p92 = scmp.ne.s32.totalorder %s78, %s79
      %p93 = scmp.eq.s32.totalorder %s24, 1
      %p94 = por %p92, %p93
      %p96 = scmp.ne.s32.totalorder %s79, %s95
      %p97 = scmp.eq.s32.totalorder %s24, 0
      %p98 = por %p96, %p97
      %s100 = sadd.s32 %s99, 1
      %p103 = scmp.eq.s32.totalorder %s18, 1
      %p104 = scmp.ne.s32.totalorder %s99, %s101
      %p105 = scmp.eq.s32.totalorder %s18, 0
      %p106 = por %p104, %p105
      %p107 = scmp.ne.s32.totalorder %s99, %s101
      %p108 = scmp.eq.s32.totalorder %s23, 1
      %p109 = por %p107, %p108
      %p110 = scmp.ne.s32.totalorder %s101, %s102
      %p111 = scmp.eq.s32.totalorder %s23, 0
      %p112 = por %p110, %p111
      %p113 = scmp.ne.s32.totalorder %s101, %s102
      %p114 = scmp.eq.s32.totalorder %s24, 1
      %p115 = por %p113, %p114
      %p117 = scmp.ne.s32.totalorder %s102, %s116
      %p118 = scmp.eq.s32.totalorder %s24, 0
      %p119 = por %p117, %p118
      %p120 = scmp.le.s32.totalorder 1, %s18
      %p121 = scmp.lt.s32.totalorder %s18, 3
      %p122 = pnand %p120, %p121
      %p123 = pneg %p122
      // Predicated region
      $region9: #{tpu_custom_call.1} parent=5 // pred_check
        _
      $region10: #{tpu_custom_call.1} parent=5 // pred_check_branch
        %125 = sbr.rel (%p122) target = $region12
      $region11: #{tpu_custom_call.1} parent=5 // pred_region
        %s126 = ssub.s32 %s18, 1
        // Predicated region
        $region13: #{tpu_custom_call.1} parent=11 // pred_check
          %p127 = pneg %p65
        $region14: #{tpu_custom_call.1} parent=11 // pred_check_branch
          %129 = sbr.rel (%p127) target = $region16
        $region15: #{tpu_custom_call.1} parent=11 // pred_region
          %s131 = ssub.s32 9216, 9216
          %132 = vsyncadd [#allocation7], %s131
          %s133 = sshll.u32 [#allocation6], 4
          %s134 = int_to_ptr.vmem [resolvable:$true] %s133
          %139 = dma.hbm_to_vmem [thread:$0]  %s1, 9216, %s134, [#allocation7], 64, 64, 4
        $region16: #{tpu_custom_call.1} parent=11 // pred_fallthru
          _
      $region12: #{tpu_custom_call.1} parent=5 // pred_fallthru
        _
      %p140 = scmp.lt.s32.totalorder %s18, 2
      // Predicated region
      $region17: #{tpu_custom_call.1} parent=5 // pred_check
        %p141 = pneg %p140
      $region18: #{tpu_custom_call.1} parent=5 // pred_check_branch
        %143 = sbr.rel (%p141) target = $region20
      $region19: #{tpu_custom_call.1} parent=5 // pred_region
        // Predicated region
        $region21: #{tpu_custom_call.1} parent=19 // pred_check
          %p144 = pneg %p38
        $region22: #{tpu_custom_call.1} parent=19 // pred_check_branch
          %146 = sbr.rel (%p144) target = $region24
        $region23: #{tpu_custom_call.1} parent=19 // pred_region
          %s147 = sand.u32 %s28, 1
          %s148 = scalar_lea.sflag [#allocation4], %s147
          %s149 = sand.u32 %s28, 1
          %s150 = smul.addr %s149, 256
          %s151 = scalar_lea.vmem [#allocation3], %s150
          %s153 = ssub.s32 4096, 4096
          %154 = vsyncadd %s148, %s153
          %s155 = smul.addr %s18, 32
          %s156 = smul.addr %s155, 128
          %s157 = scalar_lea.hbm %s0, %s156
          %s158 = sshll.u32 %s151, 4
          %s159 = int_to_ptr.vmem [resolvable:$true] %s158
          %164 = dma.hbm_to_vmem [thread:$0]  %s157, 4096, %s159, %s148, 128, 128, 8
        $region24: #{tpu_custom_call.1} parent=19 // pred_fallthru
          _
      $region20: #{tpu_custom_call.1} parent=5 // pred_fallthru
        _
      %p165 = scmp.le.s32.totalorder 1, %s18
      %p166 = scmp.lt.s32.totalorder %s18, 3
      %p167 = pnand %p165, %p166
      %p168 = pneg %p167
      // Predicated region
      $region25: #{tpu_custom_call.1} parent=5 // pred_check
        _
      $region26: #{tpu_custom_call.1} parent=5 // pred_check_branch
        %170 = sbr.rel (%p167) target = $region28
      $region27: #{tpu_custom_call.1} parent=5 // pred_region
        %s171 = ssub.s32 %s18, 1
        %s172 = sand.u32 %s31, 1
        %s173 = scalar_lea.sflag [#allocation4], %s172
        %s174 = sand.u32 %s31, 1
        %s175 = smul.addr %s174, 256
        %s176 = scalar_lea.vmem [#allocation3], %s175
        // Predicated region
        $region29: #{tpu_custom_call.1} parent=27 // pred_check
          %p177 = pneg %p44
        $region30: #{tpu_custom_call.1} parent=27 // pred_check_branch
          %179 = sbr.rel (%p177) target = $region32
        $region31: #{tpu_custom_call.1} parent=27 // pred_region
          %180 = dma.done %s173, 4096
        $region32: #{tpu_custom_call.1} parent=27 // pred_fallthru
          _
        // Predicated region
        $region33: #{tpu_custom_call.1} parent=27 // pred_check
          %p181 = pneg %p65
        $region34: #{tpu_custom_call.1} parent=27 // pred_check_branch
          %183 = sbr.rel (%p181) target = $region36
        $region35: #{tpu_custom_call.1} parent=27 // pred_region
          %184 = dma.done [#allocation7], 9216
        $region36: #{tpu_custom_call.1} parent=27 // pred_fallthru
          _
        %s185 = sand.u32 %s31, 1
        %s186 = scalar_lea.sflag [#allocation4], %s185
        %s187 = sand.u32 %s31, 1
        %s188 = smul.addr %s187, 256
        %s189 = scalar_lea.vmem [#allocation3], %s188
        %p190 = pneg %p44
        %p191 = pneg %p41
        %p192 = pneg %p65
        %p193 = pneg %p62
        %p194 = pneg %p91
        %p195 = pneg %p88
        %s196 = sand.u32 %s78, 1
        %s197 = scalar_lea.sflag [#allocation5], %s196
        %s198 = sand.u32 %s78, 1
        %s199 = smul.addr %s198, 256
        %s200 = scalar_lea.vmem [#allocation8], %s199
        %p201 = pneg %p112
        %p202 = pneg %p109
        %p204 = scmp.eq.s32.totalorder %s23, 0
        // Predicated region
        $region37: #{tpu_custom_call.1} parent=27 // pred_check
          %p205 = pneg %p204
        $region38: #{tpu_custom_call.1} parent=27 // pred_check_branch
          %207 = sbr.rel (%p205) target = $region40
        $region39: #{tpu_custom_call.1} parent=27 // pred_region
          %208 = vst [vmem:[#allocation2] sm:$0xff] 0.0
          %209 = vst [vmem:[#allocation2 + $0x8] sm:$0xff] 0.0
          %210 = vst [vmem:[#allocation2 + $0x10] sm:$0x3] 0.0
          %s211 = scalar_lea.vmem [#allocation2], 408
          %212 = vst [vmem:[%s211] sm:$0xff] 0.0
          %213 = vst [vmem:[%s211 + $0x8] sm:$0xff] 0.0
          %214 = vst [vmem:[%s211 + $0x10] sm:$0x3] 0.0
          %215 = vst [vmem:[#allocation2] sm:$0x1] 0.0
          %216 = vst [vmem:[#allocation2 + $0x18] sm:$0x1] 0.0
          %217 = vst [vmem:[#allocation2 + $0x30] sm:$0x1] 0.0
          %218 = vst [vmem:[#allocation2 + $0x48] sm:$0x1] 0.0
          %219 = vst [vmem:[#allocation2 + $0x60] sm:$0x1] 0.0
          %220 = vst [vmem:[#allocation2 + $0x78] sm:$0x1] 0.0
          %221 = vst [vmem:[#allocation2 + $0x90] sm:$0x1] 0.0
          %222 = vst [vmem:[#allocation2 + $0xa8] sm:$0x1] 0.0
          %223 = vst [vmem:[#allocation2 + $0xc0] sm:$0x1] 0.0
          %224 = vst [vmem:[#allocation2 + $0xd8] sm:$0x1] 0.0
          %225 = vst [vmem:[#allocation2 + $0xf0] sm:$0x1] 0.0
          %226 = vst [vmem:[#allocation2 + $0x108] sm:$0x1] 0.0
          %227 = vst [vmem:[#allocation2 + $0x120] sm:$0x1] 0.0
          %228 = vst [vmem:[#allocation2 + $0x138] sm:$0x1] 0.0
          %229 = vst [vmem:[#allocation2 + $0x150] sm:$0x1] 0.0
          %230 = vst [vmem:[#allocation2 + $0x168] sm:$0x1] 0.0
          %231 = vst [vmem:[#allocation2 + $0x180] sm:$0x1] 0.0
          %232 = vst [vmem:[#allocation2 + $0x198] sm:$0x1] 0.0
          %233 = vst [vmem:[#allocation2 + $0x11] sm:$0x1] 0.0
          %234 = vst [vmem:[#allocation2 + $0x29] sm:$0x1] 0.0
          %235 = vst [vmem:[#allocation2 + $0x41] sm:$0x1] 0.0
          %236 = vst [vmem:[#allocation2 + $0x59] sm:$0x1] 0.0
          %237 = vst [vmem:[#allocation2 + $0x71] sm:$0x1] 0.0
          %238 = vst [vmem:[#allocation2 + $0x89] sm:$0x1] 0.0
          %239 = vst [vmem:[#allocation2 + $0xa1] sm:$0x1] 0.0
          %240 = vst [vmem:[#allocation2 + $0xb9] sm:$0x1] 0.0
          %241 = vst [vmem:[#allocation2 + $0xd1] sm:$0x1] 0.0
          %242 = vst [vmem:[#allocation2 + $0xe9] sm:$0x1] 0.0
          %243 = vst [vmem:[#allocation2 + $0x101] sm:$0x1] 0.0
          %244 = vst [vmem:[#allocation2 + $0x119] sm:$0x1] 0.0
          %245 = vst [vmem:[#allocation2 + $0x131] sm:$0x1] 0.0
          %246 = vst [vmem:[#allocation2 + $0x149] sm:$0x1] 0.0
          %247 = vst [vmem:[#allocation2 + $0x161] sm:$0x1] 0.0
          %248 = vst [vmem:[#allocation2 + $0x179] sm:$0x1] 0.0
          %249 = vst [vmem:[#allocation2 + $0x191] sm:$0x1] 0.0
          %250 = vst [vmem:[#allocation2 + $0x1a9] sm:$0x1] 0.0
          %251 = vst [vmem:[#allocation9] sm:$0x3] 0.0
        $region40: #{tpu_custom_call.1} parent=27 // pred_fallthru
          _
        %v252 = vld [vmem:[%s176] sm:$0xff]
        %v253 = vld [vmem:[%s176 + $0x8] sm:$0xff]
        %v254 = vld [vmem:[%s176 + $0x10] sm:$0xff]
        %v255 = vld [vmem:[%s176 + $0x18] sm:$0xff]
        %v256 = vld [vmem:[%s176 + $0x20] sm:$0xff]
        %v257 = vld [vmem:[%s176 + $0x28] sm:$0xff]
        %v258 = vld [vmem:[%s176 + $0x30] sm:$0xff]
        %v259 = vld [vmem:[%s176 + $0x38] sm:$0xff]
        %v260 = vld [vmem:[%s176 + $0x40] sm:$0xff]
        %v261 = vld [vmem:[%s176 + $0x48] sm:$0xff]
        %v262 = vld [vmem:[%s176 + $0x50] sm:$0xff]
        %v263 = vld [vmem:[%s176 + $0x58] sm:$0xff]
        %v264 = vld [vmem:[%s176 + $0x60] sm:$0xff]
        %v265 = vld [vmem:[%s176 + $0x68] sm:$0xff]
        %v266 = vld [vmem:[%s176 + $0x70] sm:$0xff]
        %v267 = vld [vmem:[%s176 + $0x78] sm:$0xff]
        %v268 = vld [vmem:[%s176 + $0x80] sm:$0xff]
        %v269 = vld [vmem:[%s176 + $0x88] sm:$0xff]
        %v270 = vld [vmem:[%s176 + $0x90] sm:$0xff]
        %v271 = vld [vmem:[%s176 + $0x98] sm:$0xff]
        %v272 = vld [vmem:[%s176 + $0xa0] sm:$0xff]
        %v273 = vld [vmem:[%s176 + $0xa8] sm:$0xff]
        %v274 = vld [vmem:[%s176 + $0xb0] sm:$0xff]
        %v275 = vld [vmem:[%s176 + $0xb8] sm:$0xff]
        %v276 = vld [vmem:[%s176 + $0xc0] sm:$0xff]
        %v277 = vld [vmem:[%s176 + $0xc8] sm:$0xff]
        %v278 = vld [vmem:[%s176 + $0xd0] sm:$0xff]
        %v279 = vld [vmem:[%s176 + $0xd8] sm:$0xff]
        %v280 = vld [vmem:[%s176 + $0xe0] sm:$0xff]
        %v281 = vld [vmem:[%s176 + $0xe8] sm:$0xff]
        %v282 = vld [vmem:[%s176 + $0xf0] sm:$0xff]
        %v283 = vld [vmem:[%s176 + $0xf8] sm:$0xff]
        %s284 = scalar_lea.vmem [#allocation2], 24
        %285 = vst [vmem:[%s284 + $0x1] sm:$0xff] %v252
        %286 = vst [vmem:[%s284 + $0x9] sm:$0xff] %v253
        %287 = vst [vmem:[%s284 + $0x19] sm:$0xff] %v254
        %288 = vst [vmem:[%s284 + $0x21] sm:$0xff] %v255
        %289 = vst [vmem:[%s284 + $0x31] sm:$0xff] %v256
        %290 = vst [vmem:[%s284 + $0x39] sm:$0xff] %v257
        %291 = vst [vmem:[%s284 + $0x49] sm:$0xff] %v258
        %292 = vst [vmem:[%s284 + $0x51] sm:$0xff] %v259
        %293 = vst [vmem:[%s284 + $0x61] sm:$0xff] %v260
        %294 = vst [vmem:[%s284 + $0x69] sm:$0xff] %v261
        %295 = vst [vmem:[%s284 + $0x79] sm:$0xff] %v262
        %296 = vst [vmem:[%s284 + $0x81] sm:$0xff] %v263
        %297 = vst [vmem:[%s284 + $0x91] sm:$0xff] %v264
        %298 = vst [vmem:[%s284 + $0x99] sm:$0xff] %v265
        %299 = vst [vmem:[%s284 + $0xa9] sm:$0xff] %v266
        %300 = vst [vmem:[%s284 + $0xb1] sm:$0xff] %v267
        %301 = vst [vmem:[%s284 + $0xc1] sm:$0xff] %v268
        %302 = vst [vmem:[%s284 + $0xc9] sm:$0xff] %v269
        %303 = vst [vmem:[%s284 + $0xd9] sm:$0xff] %v270
        %304 = vst [vmem:[%s284 + $0xe1] sm:$0xff] %v271
        %305 = vst [vmem:[%s284 + $0xf1] sm:$0xff] %v272
        %306 = vst [vmem:[%s284 + $0xf9] sm:$0xff] %v273
        %307 = vst [vmem:[%s284 + $0x109] sm:$0xff] %v274
        %308 = vst [vmem:[%s284 + $0x111] sm:$0xff] %v275
        %309 = vst [vmem:[%s284 + $0x121] sm:$0xff] %v276
        %310 = vst [vmem:[%s284 + $0x129] sm:$0xff] %v277
        %311 = vst [vmem:[%s284 + $0x139] sm:$0xff] %v278
        %312 = vst [vmem:[%s284 + $0x141] sm:$0xff] %v279
        %313 = vst [vmem:[%s284 + $0x151] sm:$0xff] %v280
        %314 = vst [vmem:[%s284 + $0x159] sm:$0xff] %v281
        %315 = vst [vmem:[%s284 + $0x169] sm:$0xff] %v282
        %316 = vst [vmem:[%s284 + $0x171] sm:$0xff] %v283
        %v317 = vld [vmem:[#allocation2] sm:$0xff]
        %v318 = vld [vmem:[#allocation2 + $0x8] sm:$0xff]
        %v319 = vld [vmem:[#allocation2 + $0x18] sm:$0xff]
        %v320 = vld [vmem:[#allocation2 + $0x20] sm:$0xff]
        %v321 = vld [vmem:[#allocation2 + $0x30] sm:$0xff]
        %v322 = vld [vmem:[#allocation2 + $0x38] sm:$0xff]
        %v323 = vld [vmem:[#allocation2 + $0x48] sm:$0xff]
        %v324 = vld [vmem:[#allocation2 + $0x50] sm:$0xff]
        %v325 = vld [vmem:[#allocation2 + $0x60] sm:$0xff]
        %v326 = vld [vmem:[#allocation2 + $0x68] sm:$0xff]
        %v327 = vld [vmem:[#allocation2 + $0x78] sm:$0xff]
        %v328 = vld [vmem:[#allocation2 + $0x80] sm:$0xff]
        %v329 = vld [vmem:[#allocation2 + $0x90] sm:$0xff]
        %v330 = vld [vmem:[#allocation2 + $0x98] sm:$0xff]
        %v331 = vld [vmem:[#allocation2 + $0xa8] sm:$0xff]
        %v332 = vld [vmem:[#allocation2 + $0xb0] sm:$0xff]
        %v333 = vld [vmem:[#allocation2 + $0xc0] sm:$0xff]
        %v334 = vld [vmem:[#allocation2 + $0xc8] sm:$0xff]
        %v335 = vld [vmem:[#allocation2 + $0xd8] sm:$0xff]
        %v336 = vld [vmem:[#allocation2 + $0xe0] sm:$0xff]
        %v337 = vld [vmem:[#allocation2 + $0xf0] sm:$0xff]
        %v338 = vld [vmem:[#allocation2 + $0xf8] sm:$0xff]
        %v339 = vld [vmem:[#allocation2 + $0x108] sm:$0xff]
        %v340 = vld [vmem:[#allocation2 + $0x110] sm:$0xff]
        %v341 = vld [vmem:[#allocation2 + $0x120] sm:$0xff]
        %v342 = vld [vmem:[#allocation2 + $0x128] sm:$0xff]
        %v343 = vld [vmem:[#allocation2 + $0x138] sm:$0xff]
        %v344 = vld [vmem:[#allocation2 + $0x140] sm:$0xff]
        %v345 = vld [vmem:[#allocation2 + $0x150] sm:$0xff]
        %v346 = vld [vmem:[#allocation2 + $0x158] sm:$0xff]
        %v347 = vld [vmem:[#allocation2 + $0x168] sm:$0xff]
        %v348 = vld [vmem:[#allocation2 + $0x170] sm:$0xff]
        %v349 = vld [vmem:[#allocation2 + $0x180] sm:$0xff]
        %v350 = vld [vmem:[#allocation2 + $0x188] sm:$0xff]
        %v351 = vld [vmem:[#allocation2 + $0x198] sm:$0xff]
        %v352 = vld [vmem:[#allocation2 + $0x1a0] sm:$0xff]
        %v353 = vpack.c.bf16 %v318, %v317
        %v354 = vpack.c.bf16 %v320, %v319
        %v355 = vpack.c.bf16 %v322, %v321
        %v356 = vpack.c.bf16 %v324, %v323
        %v357 = vpack.c.bf16 %v326, %v325
        %v358 = vpack.c.bf16 %v328, %v327
        %v359 = vpack.c.bf16 %v330, %v329
        %v360 = vpack.c.bf16 %v332, %v331
        %v361 = vpack.c.bf16 %v334, %v333
        %v362 = vpack.c.bf16 %v336, %v335
        %v363 = vpack.c.bf16 %v338, %v337
        %v364 = vpack.c.bf16 %v340, %v339
        %v365 = vpack.c.bf16 %v342, %v341
        %v366 = vpack.c.bf16 %v344, %v343
        %v367 = vpack.c.bf16 %v346, %v345
        %v368 = vpack.c.bf16 %v348, %v347
        %v369 = vpack.c.bf16 %v350, %v349
        %v370 = vpack.c.bf16 %v352, %v351
        %v371 = vld [vmem:[#allocation6] sm:$0xf]
        %v372 = vld [vmem:[#allocation6 + $0x4] sm:$0xf]
        %v373 = vld [vmem:[#allocation6 + $0x8] sm:$0xf]
        %v374 = vld [vmem:[#allocation6 + $0xc] sm:$0xf]
        %v375 = vld [vmem:[#allocation6 + $0x10] sm:$0xf]
        %v376 = vld [vmem:[#allocation6 + $0x14] sm:$0xf]
        %v377 = vld [vmem:[#allocation6 + $0x18] sm:$0xf]
        %v378 = vld [vmem:[#allocation6 + $0x1c] sm:$0xf]
        %v379 = vld [vmem:[#allocation6 + $0x20] sm:$0xf]
        %v380 = vld [vmem:[#allocation6 + $0x24] sm:$0xf]
        %v381 = vld [vmem:[#allocation6 + $0x28] sm:$0xf]
        %v382 = vld [vmem:[#allocation6 + $0x2c] sm:$0xf]
        %v383 = vld [vmem:[#allocation6 + $0x30] sm:$0xf]
        %v384 = vld [vmem:[#allocation6 + $0x34] sm:$0xf]
        %v385 = vld [vmem:[#allocation6 + $0x38] sm:$0xf]
        %v386 = vld [vmem:[#allocation6 + $0x3c] sm:$0xf]
        %v387 = vld [vmem:[#allocation6 + $0x40] sm:$0xf]
        %v388 = vld [vmem:[#allocation6 + $0x44] sm:$0xf]
        %v389 = vld [vmem:[#allocation6 + $0x48] sm:$0xf]
        %v390 = vld [vmem:[#allocation6 + $0x4c] sm:$0xf]
        %v391 = vld [vmem:[#allocation6 + $0x50] sm:$0xf]
        %v392 = vld [vmem:[#allocation6 + $0x54] sm:$0xf]
        %v393 = vld [vmem:[#allocation6 + $0x58] sm:$0xf]
        %v394 = vld [vmem:[#allocation6 + $0x5c] sm:$0xf]
        %v395 = vld [vmem:[#allocation6 + $0x60] sm:$0xf]
        %v396 = vld [vmem:[#allocation6 + $0x64] sm:$0xf]
        %v397 = vld [vmem:[#allocation6 + $0x68] sm:$0xf]
        %v398 = vld [vmem:[#allocation6 + $0x6c] sm:$0xf]
        %v399 = vld [vmem:[#allocation6 + $0x70] sm:$0xf]
        %v400 = vld [vmem:[#allocation6 + $0x74] sm:$0xf]
        %v401 = vld [vmem:[#allocation6 + $0x78] sm:$0xf]
        %v402 = vld [vmem:[#allocation6 + $0x7c] sm:$0xf]
        %v403 = vld [vmem:[#allocation6 + $0x80] sm:$0xf]
        %v404 = vld [vmem:[#allocation6 + $0x84] sm:$0xf]
        %v405 = vld [vmem:[#allocation6 + $0x88] sm:$0xf]
        %v406 = vld [vmem:[#allocation6 + $0x8c] sm:$0xf]
        %v407 = vld [vmem:[#allocation6 + $0x90] sm:$0xf]
        %v408 = vld [vmem:[#allocation6 + $0x94] sm:$0xf]
        %v409 = vld [vmem:[#allocation6 + $0x98] sm:$0xf]
        %v410 = vld [vmem:[#allocation6 + $0x9c] sm:$0xf]
        %v411 = vld [vmem:[#allocation6 + $0xa0] sm:$0xf]
        %v412 = vld [vmem:[#allocation6 + $0xa4] sm:$0xf]
        %v413 = vld [vmem:[#allocation6 + $0xa8] sm:$0xf]
        %v414 = vld [vmem:[#allocation6 + $0xac] sm:$0xf]
        %v415 = vld [vmem:[#allocation6 + $0xb0] sm:$0xf]
        %v416 = vld [vmem:[#allocation6 + $0xb4] sm:$0xf]
        %v417 = vld [vmem:[#allocation6 + $0xb8] sm:$0xf]
        %v418 = vld [vmem:[#allocation6 + $0xbc] sm:$0xf]
        %v419 = vld [vmem:[#allocation2 + $0x1] sm:$0xff]
        %v420 = vld [vmem:[#allocation2 + $0x9] sm:$0xff]
        %v421 = vld [vmem:[#allocation2 + $0x19] sm:$0xff]
        %v422 = vld [vmem:[#allocation2 + $0x21] sm:$0xff]
        %v423 = vld [vmem:[#allocation2 + $0x31] sm:$0xff]
        %v424 = vld [vmem:[#allocation2 + $0x39] sm:$0xff]
        %v425 = vld [vmem:[#allocation2 + $0x49] sm:$0xff]
        %v426 = vld [vmem:[#allocation2 + $0x51] sm:$0xff]
        %v427 = vld [vmem:[#allocation2 + $0x61] sm:$0xff]
        %v428 = vld [vmem:[#allocation2 + $0x69] sm:$0xff]
        %v429 = vld [vmem:[#allocation2 + $0x79] sm:$0xff]
        %v430 = vld [vmem:[#allocation2 + $0x81] sm:$0xff]
        %v431 = vld [vmem:[#allocation2 + $0x91] sm:$0xff]
        %v432 = vld [vmem:[#allocation2 + $0x99] sm:$0xff]
        %v433 = vld [vmem:[#allocation2 + $0xa9] sm:$0xff]
        %v434 = vld [vmem:[#allocation2 + $0xb1] sm:$0xff]
        %v435 = vld [vmem:[#allocation2 + $0xc1] sm:$0xff]
        %v436 = vld [vmem:[#allocation2 + $0xc9] sm:$0xff]
        %v437 = vld [vmem:[#allocation2 + $0xd9] sm:$0xff]
        %v438 = vld [vmem:[#allocation2 + $0xe1] sm:$0xff]
        %v439 = vld [vmem:[#allocation2 + $0xf1] sm:$0xff]
        %v440 = vld [vmem:[#allocation2 + $0xf9] sm:$0xff]
        %v441 = vld [vmem:[#allocation2 + $0x109] sm:$0xff]
        %v442 = vld [vmem:[#allocation2 + $0x111] sm:$0xff]
        %v443 = vld [vmem:[#allocation2 + $0x121] sm:$0xff]
        %v444 = vld [vmem:[#allocation2 + $0x129] sm:$0xff]
        %v445 = vld [vmem:[#allocation2 + $0x139] sm:$0xff]
        %v446 = vld [vmem:[#allocation2 + $0x141] sm:$0xff]
        %v447 = vld [vmem:[#allocation2 + $0x151] sm:$0xff]
        %v448 = vld [vmem:[#allocation2 + $0x159] sm:$0xff]
        %v449 = vld [vmem:[#allocation2 + $0x169] sm:$0xff]
        %v450 = vld [vmem:[#allocation2 + $0x171] sm:$0xff]
        %v451 = vld [vmem:[#allocation2 + $0x181] sm:$0xff]
        %v452 = vld [vmem:[#allocation2 + $0x189] sm:$0xff]
        %v453 = vld [vmem:[#allocation2 + $0x199] sm:$0xff]
        %v454 = vld [vmem:[#allocation2 + $0x1a1] sm:$0xff]
        %v455 = vpack.c.bf16 %v420, %v419
        %v456 = vpack.c.bf16 %v422, %v421
        %v457 = vpack.c.bf16 %v424, %v423
        %v458 = vpack.c.bf16 %v426, %v425
        %v459 = vpack.c.bf16 %v428, %v427
        %v460 = vpack.c.bf16 %v430, %v429
        %v461 = vpack.c.bf16 %v432, %v431
        %v462 = vpack.c.bf16 %v434, %v433
        %v463 = vpack.c.bf16 %v436, %v435
        %v464 = vpack.c.bf16 %v438, %v437
        %v465 = vpack.c.bf16 %v440, %v439
        %v466 = vpack.c.bf16 %v442, %v441
        %v467 = vpack.c.bf16 %v444, %v443
        %v468 = vpack.c.bf16 %v446, %v445
        %v469 = vpack.c.bf16 %v448, %v447
        %v470 = vpack.c.bf16 %v450, %v449
        %v471 = vpack.c.bf16 %v452, %v451
        %v472 = vpack.c.bf16 %v454, %v453
        %s473 = scalar_lea.vmem [#allocation6], 192
        %v474 = vld [vmem:[%s473] sm:$0xf]
        %v475 = vld [vmem:[%s473 + $0x4] sm:$0xf]
        %v476 = vld [vmem:[%s473 + $0x8] sm:$0xf]
        %v477 = vld [vmem:[%s473 + $0xc] sm:$0xf]
        %v478 = vld [vmem:[%s473 + $0x10] sm:$0xf]
        %v479 = vld [vmem:[%s473 + $0x14] sm:$0xf]
        %v480 = vld [vmem:[%s473 + $0x18] sm:$0xf]
        %v481 = vld [vmem:[%s473 + $0x1c] sm:$0xf]
        %v482 = vld [vmem:[%s473 + $0x20] sm:$0xf]
        %v483 = vld [vmem:[%s473 + $0x24] sm:$0xf]
        %v484 = vld [vmem:[%s473 + $0x28] sm:$0xf]
        %v485 = vld [vmem:[%s473 + $0x2c] sm:$0xf]
        %v486 = vld [vmem:[%s473 + $0x30] sm:$0xf]
        %v487 = vld [vmem:[%s473 + $0x34] sm:$0xf]
        %v488 = vld [vmem:[%s473 + $0x38] sm:$0xf]
        %v489 = vld [vmem:[%s473 + $0x3c] sm:$0xf]
        %v490 = vld [vmem:[%s473 + $0x40] sm:$0xf]
        %v491 = vld [vmem:[%s473 + $0x44] sm:$0xf]
        %v492 = vld [vmem:[%s473 + $0x48] sm:$0xf]
        %v493 = vld [vmem:[%s473 + $0x4c] sm:$0xf]
        %v494 = vld [vmem:[%s473 + $0x50] sm:$0xf]
        %v495 = vld [vmem:[%s473 + $0x54] sm:$0xf]
        %v496 = vld [vmem:[%s473 + $0x58] sm:$0xf]
        %v497 = vld [vmem:[%s473 + $0x5c] sm:$0xf]
        %v498 = vld [vmem:[%s473 + $0x60] sm:$0xf]
        %v499 = vld [vmem:[%s473 + $0x64] sm:$0xf]
        %v500 = vld [vmem:[%s473 + $0x68] sm:$0xf]
        %v501 = vld [vmem:[%s473 + $0x6c] sm:$0xf]
        %v502 = vld [vmem:[%s473 + $0x70] sm:$0xf]
        %v503 = vld [vmem:[%s473 + $0x74] sm:$0xf]
        %v504 = vld [vmem:[%s473 + $0x78] sm:$0xf]
        %v505 = vld [vmem:[%s473 + $0x7c] sm:$0xf]
        %v506 = vld [vmem:[%s473 + $0x80] sm:$0xf]
        %v507 = vld [vmem:[%s473 + $0x84] sm:$0xf]
        %v508 = vld [vmem:[%s473 + $0x88] sm:$0xf]
        %v509 = vld [vmem:[%s473 + $0x8c] sm:$0xf]
        %v510 = vld [vmem:[%s473 + $0x90] sm:$0xf]
        %v511 = vld [vmem:[%s473 + $0x94] sm:$0xf]
        %v512 = vld [vmem:[%s473 + $0x98] sm:$0xf]
        %v513 = vld [vmem:[%s473 + $0x9c] sm:$0xf]
        %v514 = vld [vmem:[%s473 + $0xa0] sm:$0xf]
        %v515 = vld [vmem:[%s473 + $0xa4] sm:$0xf]
        %v516 = vld [vmem:[%s473 + $0xa8] sm:$0xf]
        %v517 = vld [vmem:[%s473 + $0xac] sm:$0xf]
        %v518 = vld [vmem:[%s473 + $0xb0] sm:$0xf]
        %v519 = vld [vmem:[%s473 + $0xb4] sm:$0xf]
        %v520 = vld [vmem:[%s473 + $0xb8] sm:$0xf]
        %v521 = vld [vmem:[%s473 + $0xbc] sm:$0xf]
        %v570 = vunpack.c.l.b16 %v474
        %v571 = vunpack.c.l.b16 %v475
        %v572 = vunpack.c.l.b16 %v476
        %v573 = vunpack.c.l.b16 %v477
        %v574 = vunpack.c.l.b16 %v478
        %v575 = vunpack.c.l.b16 %v479
        %v576 = vunpack.c.l.b16 %v480
        %v577 = vunpack.c.l.b16 %v481
        %v578 = vunpack.c.l.b16 %v482
        %v579 = vunpack.c.l.b16 %v483
        %v580 = vunpack.c.l.b16 %v484
        %v581 = vunpack.c.l.b16 %v485
        %v582 = vunpack.c.l.b16 %v486
        %v583 = vunpack.c.l.b16 %v487
        %v584 = vunpack.c.l.b16 %v488
        %v585 = vunpack.c.l.b16 %v489
        %v586 = vunpack.c.l.b16 %v490
        %v587 = vunpack.c.l.b16 %v491
        %v588 = vunpack.c.l.b16 %v492
        %v589 = vunpack.c.l.b16 %v493
        %v590 = vunpack.c.l.b16 %v494
        %v591 = vunpack.c.l.b16 %v495
        %v592 = vunpack.c.l.b16 %v496
        %v593 = vunpack.c.l.b16 %v497
        %v594 = vunpack.c.l.b16 %v498
        %v595 = vunpack.c.l.b16 %v499
        %v596 = vunpack.c.l.b16 %v500
        %v597 = vunpack.c.l.b16 %v501
        %v598 = vunpack.c.l.b16 %v502
        %v599 = vunpack.c.l.b16 %v503
        %v600 = vunpack.c.l.b16 %v504
        %v601 = vunpack.c.l.b16 %v505
        %v602 = vunpack.c.l.b16 %v506
        %v603 = vunpack.c.l.b16 %v507
        %v604 = vunpack.c.l.b16 %v508
        %v605 = vunpack.c.l.b16 %v509
        %v606 = vunpack.c.l.b16 %v510
        %v607 = vunpack.c.l.b16 %v511
        %v608 = vunpack.c.l.b16 %v512
        %v609 = vunpack.c.l.b16 %v513
        %v610 = vunpack.c.l.b16 %v514
        %v611 = vunpack.c.l.b16 %v515
        %v612 = vunpack.c.l.b16 %v516
        %v613 = vunpack.c.l.b16 %v517
        %v614 = vunpack.c.l.b16 %v518
        %v615 = vunpack.c.l.b16 %v519
        %v616 = vunpack.c.l.b16 %v520
        %v617 = vunpack.c.l.b16 %v521
        %v618 = vpack.c.b16 %v571, %v570
        %v619 = vpack.c.b16 %v573, %v572
        %v620 = vpack.c.b16 %v575, %v574
        %v621 = vpack.c.b16 %v577, %v576
        %v622 = vpack.c.b16 %v579, %v578
        %v623 = vpack.c.b16 %v581, %v580
        %v624 = vpack.c.b16 %v583, %v582
        %v625 = vpack.c.b16 %v585, %v584
        %v626 = vpack.c.b16 %v587, %v586
        %v627 = vpack.c.b16 %v589, %v588
        %v628 = vpack.c.b16 %v591, %v590
        %v629 = vpack.c.b16 %v593, %v592
        %v630 = vpack.c.b16 %v595, %v594
        %v631 = vpack.c.b16 %v597, %v596
        %v632 = vpack.c.b16 %v599, %v598
        %v633 = vpack.c.b16 %v601, %v600
        %v634 = vpack.c.b16 %v603, %v602
        %v635 = vpack.c.b16 %v605, %v604
        %v636 = vpack.c.b16 %v607, %v606
        %v637 = vpack.c.b16 %v609, %v608
        %v638 = vpack.c.b16 %v611, %v610
        %v639 = vpack.c.b16 %v613, %v612
        %v640 = vpack.c.b16 %v615, %v614
        %v641 = vpack.c.b16 %v617, %v616
        %666 = vmatprep.subr.bf16.mxu0 0
        %667 = vmatpush1.bf16.msra.mxu0 %v625
        %668 = vmatprep.subr.bf16.mxu0 0
        %669 = vmatpush1.bf16.msra.mxu0 %v624
        %670 = vmatprep.subr.bf16.mxu0 0
        %671 = vmatpush1.bf16.msra.mxu0 %v623
        %672 = vmatprep.subr.bf16.mxu0 0
        %673 = vmatpush1.bf16.msra.mxu0 %v622
        %674 = vmatprep.subr.bf16.mxu0 0
        %675 = vmatpush1.bf16.msra.mxu0 %v621
        %676 = vmatprep.subr.bf16.mxu0 0
        %677 = vmatpush1.bf16.msra.mxu0 %v620
        %678 = vmatprep.subr.bf16.mxu0 0
        %679 = vmatpush1.bf16.msra.mxu0 %v619
        %680 = vmatprep.subr.bf16.mxu0 0
        %681 = vmatpush1.bf16.msra.mxu0 %v618
        %682 = vmatprep.subr.bf16.mxu0 0
        %683 = vmatpush2.bf16.msra.mxu0 %v633
        %684 = vmatprep.subr.bf16.mxu0 0
        %685 = vmatpush2.bf16.msra.mxu0 %v632
        %686 = vmatprep.subr.bf16.mxu0 0
        %687 = vmatpush2.bf16.msra.mxu0 %v631
        %688 = vmatprep.subr.bf16.mxu0 0
        %689 = vmatpush2.bf16.msra.mxu0 %v630
        %690 = vmatprep.subr.bf16.mxu0 0
        %691 = vmatpush2.bf16.msra.mxu0 %v629
        %692 = vmatprep.subr.bf16.mxu0 0
        %693 = vmatpush2.bf16.msra.mxu0 %v628
        %694 = vmatprep.subr.bf16.mxu0 0
        %695 = vmatpush2.bf16.msra.mxu0 %v627
        %696 = vmatprep.subr.bf16.mxu0 0
        %697 = vmatpush2.bf16.msra.mxu0 %v626
        %698 = vmatprep.mubr.bf16.mxu0 %v456
        %699 = vmatmul.mubr.bf16.gmra.mxu0 %v455
        %v700 = vpop.f32.mrf.mxu0
        %v701 = vadd.f32 0.0, %v700
        %v702 = vpop.f32.mrf.mxu0
        %v703 = vpop.f32.mrf.mxu0
        %v704 = vadd.f32 0.0, %v703
        %v705 = vpop.f32.mrf.mxu0
        %706 = vmatprep.mubr.bf16.mxu0 %v457
        %707 = vmatmul.mubr.bf16.gmra.mxu0 %v456
        %v708 = vpop.f32.mrf.mxu0
        %v709 = vadd.f32 0.0, %v708
        %v710 = vpop.f32.mrf.mxu0
        %v711 = vpop.f32.mrf.mxu0
        %v712 = vadd.f32 0.0, %v711
        %v713 = vpop.f32.mrf.mxu0
        %714 = vmatprep.mubr.bf16.mxu0 %v458
        %715 = vmatmul.mubr.bf16.gmra.mxu0 %v457
        %v716 = vpop.f32.mrf.mxu0
        %v717 = vadd.f32 0.0, %v716
        %v718 = vpop.f32.mrf.mxu0
        %v719 = vpop.f32.mrf.mxu0
        %v720 = vadd.f32 0.0, %v719
        %v721 = vpop.f32.mrf.mxu0
        %722 = vmatprep.mubr.bf16.mxu0 %v459
        %723 = vmatmul.mubr.bf16.gmra.mxu0 %v458
        %v724 = vpop.f32.mrf.mxu0
        %v725 = vadd.f32 0.0, %v724
        %v726 = vpop.f32.mrf.mxu0
        %v727 = vpop.f32.mrf.mxu0
        %v728 = vadd.f32 0.0, %v727
        %v729 = vpop.f32.mrf.mxu0
        %730 = vmatprep.mubr.bf16.mxu0 %v460
        %731 = vmatmul.mubr.bf16.gmra.mxu0 %v459
        %v732 = vpop.f32.mrf.mxu0
        %v733 = vadd.f32 0.0, %v732
        %v734 = vpop.f32.mrf.mxu0
        %v735 = vpop.f32.mrf.mxu0
        %v736 = vadd.f32 0.0, %v735
        %v737 = vpop.f32.mrf.mxu0
        %738 = vmatprep.mubr.bf16.mxu0 %v461
        %739 = vmatmul.mubr.bf16.gmra.mxu0 %v460
        %v740 = vpop.f32.mrf.mxu0
        %v741 = vadd.f32 0.0, %v740
        %v742 = vpop.f32.mrf.mxu0
        %v743 = vpop.f32.mrf.mxu0
        %v744 = vadd.f32 0.0, %v743
        %v745 = vpop.f32.mrf.mxu0
        %746 = vmatprep.mubr.bf16.mxu0 %v462
        %747 = vmatmul.mubr.bf16.gmra.mxu0 %v461
        %v748 = vpop.f32.mrf.mxu0
        %v749 = vadd.f32 0.0, %v748
        %v750 = vpop.f32.mrf.mxu0
        %v751 = vpop.f32.mrf.mxu0
        %v752 = vadd.f32 0.0, %v751
        %v753 = vpop.f32.mrf.mxu0
        %754 = vmatprep.mubr.bf16.mxu0 %v463
        %755 = vmatmul.mubr.bf16.gmra.mxu0 %v462
        %v756 = vpop.f32.mrf.mxu0
        %v757 = vadd.f32 0.0, %v756
        %v758 = vpop.f32.mrf.mxu0
        %v759 = vpop.f32.mrf.mxu0
        %v760 = vadd.f32 0.0, %v759
        %v761 = vpop.f32.mrf.mxu0
        %762 = vmatprep.mubr.bf16.mxu0 %v464
        %763 = vmatmul.mubr.bf16.gmra.mxu0 %v463
        %v764 = vpop.f32.mrf.mxu0
        %v765 = vadd.f32 0.0, %v764
        %v766 = vpop.f32.mrf.mxu0
        %v767 = vpop.f32.mrf.mxu0
        %v768 = vadd.f32 0.0, %v767
        %v769 = vpop.f32.mrf.mxu0
        %770 = vmatprep.mubr.bf16.mxu0 %v465
        %771 = vmatmul.mubr.bf16.gmra.mxu0 %v464
        %v772 = vpop.f32.mrf.mxu0
        %v773 = vadd.f32 0.0, %v772
        %v774 = vpop.f32.mrf.mxu0
        %v775 = vpop.f32.mrf.mxu0
        %v776 = vadd.f32 0.0, %v775
        %v777 = vpop.f32.mrf.mxu0
        %778 = vmatprep.mubr.bf16.mxu0 %v466
        %779 = vmatmul.mubr.bf16.gmra.mxu0 %v465
        %v780 = vpop.f32.mrf.mxu0
        %v781 = vadd.f32 0.0, %v780
        %v782 = vpop.f32.mrf.mxu0
        %v783 = vpop.f32.mrf.mxu0
        %v784 = vadd.f32 0.0, %v783
        %v785 = vpop.f32.mrf.mxu0
        %786 = vmatprep.mubr.bf16.mxu0 %v467
        %787 = vmatmul.mubr.bf16.gmra.mxu0 %v466
        %v788 = vpop.f32.mrf.mxu0
        %v789 = vadd.f32 0.0, %v788
        %v790 = vpop.f32.mrf.mxu0
        %v791 = vpop.f32.mrf.mxu0
        %v792 = vadd.f32 0.0, %v791
        %v793 = vpop.f32.mrf.mxu0
        %794 = vmatprep.mubr.bf16.mxu0 %v468
        %795 = vmatmul.mubr.bf16.gmra.mxu0 %v467
        %v796 = vpop.f32.mrf.mxu0
        %v797 = vadd.f32 0.0, %v796
        %v798 = vpop.f32.mrf.mxu0
        %v799 = vpop.f32.mrf.mxu0
        %v800 = vadd.f32 0.0, %v799
        %v801 = vpop.f32.mrf.mxu0
        %802 = vmatprep.mubr.bf16.mxu0 %v469
        %803 = vmatmul.mubr.bf16.gmra.mxu0 %v468
        %v804 = vpop.f32.mrf.mxu0
        %v805 = vadd.f32 0.0, %v804
        %v806 = vpop.f32.mrf.mxu0
        %v807 = vpop.f32.mrf.mxu0
        %v808 = vadd.f32 0.0, %v807
        %v809 = vpop.f32.mrf.mxu0
        %810 = vmatprep.mubr.bf16.mxu0 %v470
        %811 = vmatmul.mubr.bf16.gmra.mxu0 %v469
        %v812 = vpop.f32.mrf.mxu0
        %v813 = vadd.f32 0.0, %v812
        %v814 = vpop.f32.mrf.mxu0
        %v815 = vpop.f32.mrf.mxu0
        %v816 = vadd.f32 0.0, %v815
        %v817 = vpop.f32.mrf.mxu0
        %818 = vmatprep.mubr.bf16.mxu0 %v471
        %819 = vmatmul.mubr.bf16.gmra.mxu0 %v470
        %v820 = vpop.f32.mrf.mxu0
        %v821 = vadd.f32 0.0, %v820
        %v822 = vpop.f32.mrf.mxu0
        %v823 = vpop.f32.mrf.mxu0
        %v824 = vadd.f32 0.0, %v823
        %v825 = vpop.f32.mrf.mxu0
        %826 = vdwg.mxu0
        %827 = vmatprep.subr.bf16.mxu0 0
        %828 = vmatpush1.bf16.msra.mxu0 %v641
        %829 = vmatprep.subr.bf16.mxu0 0
        %830 = vmatpush1.bf16.msra.mxu0 %v640
        %831 = vmatprep.subr.bf16.mxu0 0
        %832 = vmatpush1.bf16.msra.mxu0 %v639
        %833 = vmatprep.subr.bf16.mxu0 0
        %834 = vmatpush1.bf16.msra.mxu0 %v638
        %835 = vmatprep.subr.bf16.mxu0 0
        %836 = vmatpush1.bf16.msra.mxu0 %v637
        %837 = vmatprep.subr.bf16.mxu0 0
        %838 = vmatpush1.bf16.msra.mxu0 %v636
        %839 = vmatprep.subr.bf16.mxu0 0
        %840 = vmatpush1.bf16.msra.mxu0 %v635
        %841 = vmatprep.subr.bf16.mxu0 0
        %842 = vmatpush1.bf16.msra.mxu0 %v634
        %843 = vmatprep.subr.bf16.mxu0 0
        %844 = vmatpush2.bf16.msra.mxu0 0
        %845 = vmatprep.subr.bf16.mxu0 0
        %846 = vmatpush2.bf16.msra.mxu0 0
        %847 = vmatprep.subr.bf16.mxu0 0
        %848 = vmatpush2.bf16.msra.mxu0 0
        %849 = vmatprep.subr.bf16.mxu0 0
        %850 = vmatpush2.bf16.msra.mxu0 0
        %851 = vmatprep.subr.bf16.mxu0 0
        %852 = vmatpush2.bf16.msra.mxu0 0
        %853 = vmatprep.subr.bf16.mxu0 0
        %854 = vmatpush2.bf16.msra.mxu0 0
        %855 = vmatprep.subr.bf16.mxu0 0
        %856 = vmatpush2.bf16.msra.mxu0 0
        %857 = vmatprep.subr.bf16.mxu0 0
        %858 = vmatpush2.bf16.msra.mxu0 0
        %859 = vmatprep.mubr.bf16.mxu0 0
        %860 = vmatmul.mubr.bf16.gmra.mxu0 %v457
        %v861 = vpop.f32.mrf.mxu0
        %v862 = vadd.f32 %v701, %v861
        %v863 = vpop.f32.mrf.mxu0
        %v864 = vpop.f32.mrf.mxu0
        %v865 = vadd.f32 %v704, %v864
        %v866 = vpop.f32.mrf.mxu0
        %867 = vmatprep.mubr.bf16.mxu0 0
        %868 = vmatmul.mubr.bf16.gmra.mxu0 %v458
        %v869 = vpop.f32.mrf.mxu0
        %v870 = vadd.f32 %v709, %v869
        %v871 = vpop.f32.mrf.mxu0
        %v872 = vpop.f32.mrf.mxu0
        %v873 = vadd.f32 %v712, %v872
        %v874 = vpop.f32.mrf.mxu0
        %875 = vmatprep.mubr.bf16.mxu0 0
        %876 = vmatmul.mubr.bf16.gmra.mxu0 %v459
        %v877 = vpop.f32.mrf.mxu0
        %v878 = vadd.f32 %v717, %v877
        %v879 = vpop.f32.mrf.mxu0
        %v880 = vpop.f32.mrf.mxu0
        %v881 = vadd.f32 %v720, %v880
        %v882 = vpop.f32.mrf.mxu0
        %883 = vmatprep.mubr.bf16.mxu0 0
        %884 = vmatmul.mubr.bf16.gmra.mxu0 %v460
        %v885 = vpop.f32.mrf.mxu0
        %v886 = vadd.f32 %v725, %v885
        %v887 = vpop.f32.mrf.mxu0
        %v888 = vpop.f32.mrf.mxu0
        %v889 = vadd.f32 %v728, %v888
        %v890 = vpop.f32.mrf.mxu0
        %891 = vmatprep.mubr.bf16.mxu0 0
        %892 = vmatmul.mubr.bf16.gmra.mxu0 %v461
        %v893 = vpop.f32.mrf.mxu0
        %v894 = vadd.f32 %v733, %v893
        %v895 = vpop.f32.mrf.mxu0
        %v896 = vpop.f32.mrf.mxu0
        %v897 = vadd.f32 %v736, %v896
        %v898 = vpop.f32.mrf.mxu0
        %899 = vmatprep.mubr.bf16.mxu0 0
        %900 = vmatmul.mubr.bf16.gmra.mxu0 %v462
        %v901 = vpop.f32.mrf.mxu0
        %v902 = vadd.f32 %v741, %v901
        %v903 = vpop.f32.mrf.mxu0
        %v904 = vpop.f32.mrf.mxu0
        %v905 = vadd.f32 %v744, %v904
        %v906 = vpop.f32.mrf.mxu0
        %907 = vmatprep.mubr.bf16.mxu0 0
        %908 = vmatmul.mubr.bf16.gmra.mxu0 %v463
        %v909 = vpop.f32.mrf.mxu0
        %v910 = vadd.f32 %v749, %v909
        %v911 = vpop.f32.mrf.mxu0
        %v912 = vpop.f32.mrf.mxu0
        %v913 = vadd.f32 %v752, %v912
        %v914 = vpop.f32.mrf.mxu0
        %915 = vmatprep.mubr.bf16.mxu0 0
        %916 = vmatmul.mubr.bf16.gmra.mxu0 %v464
        %v917 = vpop.f32.mrf.mxu0
        %v918 = vadd.f32 %v757, %v917
        %v919 = vpop.f32.mrf.mxu0
        %v920 = vpop.f32.mrf.mxu0
        %v921 = vadd.f32 %v760, %v920
        %v922 = vpop.f32.mrf.mxu0
        %923 = vmatprep.mubr.bf16.mxu0 0
        %924 = vmatmul.mubr.bf16.gmra.mxu0 %v465
        %v925 = vpop.f32.mrf.mxu0
        %v926 = vadd.f32 %v765, %v925
        %v927 = vpop.f32.mrf.mxu0
        %v928 = vpop.f32.mrf.mxu0
        %v929 = vadd.f32 %v768, %v928
        %v930 = vpop.f32.mrf.mxu0
        %931 = vmatprep.mubr.bf16.mxu0 0
        %932 = vmatmul.mubr.bf16.gmra.mxu0 %v466
        %v933 = vpop.f32.mrf.mxu0
        %v934 = vadd.f32 %v773, %v933
        %v935 = vpop.f32.mrf.mxu0
        %v936 = vpop.f32.mrf.mxu0
        %v937 = vadd.f32 %v776, %v936
        %v938 = vpop.f32.mrf.mxu0
        %939 = vmatprep.mubr.bf16.mxu0 0
        %940 = vmatmul.mubr.bf16.gmra.mxu0 %v467
        %v941 = vpop.f32.mrf.mxu0
        %v942 = vadd.f32 %v781, %v941
        %v943 = vpop.f32.mrf.mxu0
        %v944 = vpop.f32.mrf.mxu0
        %v945 = vadd.f32 %v784, %v944
        %v946 = vpop.f32.mrf.mxu0
        %947 = vmatprep.mubr.bf16.mxu0 0
        %948 = vmatmul.mubr.bf16.gmra.mxu0 %v468
        %v949 = vpop.f32.mrf.mxu0
        %v950 = vadd.f32 %v789, %v949
        %v951 = vpop.f32.mrf.mxu0
        %v952 = vpop.f32.mrf.mxu0
        %v953 = vadd.f32 %v792, %v952
        %v954 = vpop.f32.mrf.mxu0
        %955 = vmatprep.mubr.bf16.mxu0 0
        %956 = vmatmul.mubr.bf16.gmra.mxu0 %v469
        %v957 = vpop.f32.mrf.mxu0
        %v958 = vadd.f32 %v797, %v957
        %v959 = vpop.f32.mrf.mxu0
        %v960 = vpop.f32.mrf.mxu0
        %v961 = vadd.f32 %v800, %v960
        %v962 = vpop.f32.mrf.mxu0
        %963 = vmatprep.mubr.bf16.mxu0 0
        %964 = vmatmul.mubr.bf16.gmra.mxu0 %v470
        %v965 = vpop.f32.mrf.mxu0
        %v966 = vadd.f32 %v805, %v965
        %v967 = vpop.f32.mrf.mxu0
        %v968 = vpop.f32.mrf.mxu0
        %v969 = vadd.f32 %v808, %v968
        %v970 = vpop.f32.mrf.mxu0
        %971 = vmatprep.mubr.bf16.mxu0 0
        %972 = vmatmul.mubr.bf16.gmra.mxu0 %v471
        %v973 = vpop.f32.mrf.mxu0
        %v974 = vadd.f32 %v813, %v973
        %v975 = vpop.f32.mrf.mxu0
        %v976 = vpop.f32.mrf.mxu0
        %v977 = vadd.f32 %v816, %v976
        %v978 = vpop.f32.mrf.mxu0
        %979 = vmatprep.mubr.bf16.mxu0 0
        %980 = vmatmul.mubr.bf16.gmra.mxu0 %v472
        %v981 = vpop.f32.mrf.mxu0
        %v982 = vadd.f32 %v821, %v981
        %v983 = vpop.f32.mrf.mxu0
        %v984 = vpop.f32.mrf.mxu0
        %v985 = vadd.f32 %v824, %v984
        %v986 = vpop.f32.mrf.mxu0
        %987 = vdwg.mxu0
        %v1036 = vunpack.c.l.b16 %v371
        %v1037 = vunpack.c.l.b16 %v372
        %v1038 = vunpack.c.l.b16 %v373
        %v1039 = vunpack.c.l.b16 %v374
        %v1040 = vunpack.c.l.b16 %v375
        %v1041 = vunpack.c.l.b16 %v376
        %v1042 = vunpack.c.l.b16 %v377
        %v1043 = vunpack.c.l.b16 %v378
        %v1044 = vunpack.c.l.b16 %v379
        %v1045 = vunpack.c.l.b16 %v380
        %v1046 = vunpack.c.l.b16 %v381
        %v1047 = vunpack.c.l.b16 %v382
        %v1048 = vunpack.c.l.b16 %v383
        %v1049 = vunpack.c.l.b16 %v384
        %v1050 = vunpack.c.l.b16 %v385
        %v1051 = vunpack.c.l.b16 %v386
        %v1052 = vunpack.c.l.b16 %v387
        %v1053 = vunpack.c.l.b16 %v388
        %v1054 = vunpack.c.l.b16 %v389
        %v1055 = vunpack.c.l.b16 %v390
        %v1056 = vunpack.c.l.b16 %v391
        %v1057 = vunpack.c.l.b16 %v392
        %v1058 = vunpack.c.l.b16 %v393
        %v1059 = vunpack.c.l.b16 %v394
        %v1060 = vunpack.c.l.b16 %v395
        %v1061 = vunpack.c.l.b16 %v396
        %v1062 = vunpack.c.l.b16 %v397
        %v1063 = vunpack.c.l.b16 %v398
        %v1064 = vunpack.c.l.b16 %v399
        %v1065 = vunpack.c.l.b16 %v400
        %v1066 = vunpack.c.l.b16 %v401
        %v1067 = vunpack.c.l.b16 %v402
        %v1068 = vunpack.c.l.b16 %v403
        %v1069 = vunpack.c.l.b16 %v404
        %v1070 = vunpack.c.l.b16 %v405
        %v1071 = vunpack.c.l.b16 %v406
        %v1072 = vunpack.c.l.b16 %v407
        %v1073 = vunpack.c.l.b16 %v408
        %v1074 = vunpack.c.l.b16 %v409
        %v1075 = vunpack.c.l.b16 %v410
        %v1076 = vunpack.c.l.b16 %v411
        %v1077 = vunpack.c.l.b16 %v412
        %v1078 = vunpack.c.l.b16 %v413
        %v1079 = vunpack.c.l.b16 %v414
        %v1080 = vunpack.c.l.b16 %v415
        %v1081 = vunpack.c.l.b16 %v416
        %v1082 = vunpack.c.l.b16 %v417
        %v1083 = vunpack.c.l.b16 %v418
        %v1084 = vpack.c.b16 %v1037, %v1036
        %v1085 = vpack.c.b16 %v1039, %v1038
        %v1086 = vpack.c.b16 %v1041, %v1040
        %v1087 = vpack.c.b16 %v1043, %v1042
        %v1088 = vpack.c.b16 %v1045, %v1044
        %v1089 = vpack.c.b16 %v1047, %v1046
        %v1090 = vpack.c.b16 %v1049, %v1048
        %v1091 = vpack.c.b16 %v1051, %v1050
        %v1092 = vpack.c.b16 %v1053, %v1052
        %v1093 = vpack.c.b16 %v1055, %v1054
        %v1094 = vpack.c.b16 %v1057, %v1056
        %v1095 = vpack.c.b16 %v1059, %v1058
        %v1096 = vpack.c.b16 %v1061, %v1060
        %v1097 = vpack.c.b16 %v1063, %v1062
        %v1098 = vpack.c.b16 %v1065, %v1064
        %v1099 = vpack.c.b16 %v1067, %v1066
        %v1100 = vpack.c.b16 %v1069, %v1068
        %v1101 = vpack.c.b16 %v1071, %v1070
        %v1102 = vpack.c.b16 %v1073, %v1072
        %v1103 = vpack.c.b16 %v1075, %v1074
        %v1104 = vpack.c.b16 %v1077, %v1076
        %v1105 = vpack.c.b16 %v1079, %v1078
        %v1106 = vpack.c.b16 %v1081, %v1080
        %v1107 = vpack.c.b16 %v1083, %v1082
        %1132 = vmatprep.subr.bf16.mxu0 0
        %1133 = vmatpush1.bf16.msra.mxu0 %v1091
        %1134 = vmatprep.subr.bf16.mxu0 0
        %1135 = vmatpush1.bf16.msra.mxu0 %v1090
        %1136 = vmatprep.subr.bf16.mxu0 0
        %1137 = vmatpush1.bf16.msra.mxu0 %v1089
        %1138 = vmatprep.subr.bf16.mxu0 0
        %1139 = vmatpush1.bf16.msra.mxu0 %v1088
        %1140 = vmatprep.subr.bf16.mxu0 0
        %1141 = vmatpush1.bf16.msra.mxu0 %v1087
        %1142 = vmatprep.subr.bf16.mxu0 0
        %1143 = vmatpush1.bf16.msra.mxu0 %v1086
        %1144 = vmatprep.subr.bf16.mxu0 0
        %1145 = vmatpush1.bf16.msra.mxu0 %v1085
        %1146 = vmatprep.subr.bf16.mxu0 0
        %1147 = vmatpush1.bf16.msra.mxu0 %v1084
        %1148 = vmatprep.subr.bf16.mxu0 0
        %1149 = vmatpush2.bf16.msra.mxu0 %v1099
        %1150 = vmatprep.subr.bf16.mxu0 0
        %1151 = vmatpush2.bf16.msra.mxu0 %v1098
        %1152 = vmatprep.subr.bf16.mxu0 0
        %1153 = vmatpush2.bf16.msra.mxu0 %v1097
        %1154 = vmatprep.subr.bf16.mxu0 0
        %1155 = vmatpush2.bf16.msra.mxu0 %v1096
        %1156 = vmatprep.subr.bf16.mxu0 0
        %1157 = vmatpush2.bf16.msra.mxu0 %v1095
        %1158 = vmatprep.subr.bf16.mxu0 0
        %1159 = vmatpush2.bf16.msra.mxu0 %v1094
        %1160 = vmatprep.subr.bf16.mxu0 0
        %1161 = vmatpush2.bf16.msra.mxu0 %v1093
        %1162 = vmatprep.subr.bf16.mxu0 0
        %1163 = vmatpush2.bf16.msra.mxu0 %v1092
        %1164 = vmatprep.mubr.bf16.mxu0 %v354
        %1165 = vmatmul.mubr.bf16.gmra.mxu0 %v353
        %v1166 = vpop.f32.mrf.mxu0
        %v1167 = vadd.f32 %v862, %v1166
        %v1168 = vpop.f32.mrf.mxu0
        %v1169 = vpop.f32.mrf.mxu0
        %v1170 = vadd.f32 %v865, %v1169
        %v1171 = vpop.f32.mrf.mxu0
        %1172 = vmatprep.mubr.bf16.mxu0 %v355
        %1173 = vmatmul.mubr.bf16.gmra.mxu0 %v354
        %v1174 = vpop.f32.mrf.mxu0
        %v1175 = vadd.f32 %v870, %v1174
        %v1176 = vpop.f32.mrf.mxu0
        %v1177 = vpop.f32.mrf.mxu0
        %v1178 = vadd.f32 %v873, %v1177
        %v1179 = vpop.f32.mrf.mxu0
        %1180 = vmatprep.mubr.bf16.mxu0 %v356
        %1181 = vmatmul.mubr.bf16.gmra.mxu0 %v355
        %v1182 = vpop.f32.mrf.mxu0
        %v1183 = vadd.f32 %v878, %v1182
        %v1184 = vpop.f32.mrf.mxu0
        %v1185 = vpop.f32.mrf.mxu0
        %v1186 = vadd.f32 %v881, %v1185
        %v1187 = vpop.f32.mrf.mxu0
        %1188 = vmatprep.mubr.bf16.mxu0 %v357
        %1189 = vmatmul.mubr.bf16.gmra.mxu0 %v356
        %v1190 = vpop.f32.mrf.mxu0
        %v1191 = vadd.f32 %v886, %v1190
        %v1192 = vpop.f32.mrf.mxu0
        %v1193 = vpop.f32.mrf.mxu0
        %v1194 = vadd.f32 %v889, %v1193
        %v1195 = vpop.f32.mrf.mxu0
        %1196 = vmatprep.mubr.bf16.mxu0 %v358
        %1197 = vmatmul.mubr.bf16.gmra.mxu0 %v357
        %v1198 = vpop.f32.mrf.mxu0
        %v1199 = vadd.f32 %v894, %v1198
        %v1200 = vpop.f32.mrf.mxu0
        %v1201 = vpop.f32.mrf.mxu0
        %v1202 = vadd.f32 %v897, %v1201
        %v1203 = vpop.f32.mrf.mxu0
        %1204 = vmatprep.mubr.bf16.mxu0 %v359
        %1205 = vmatmul.mubr.bf16.gmra.mxu0 %v358
        %v1206 = vpop.f32.mrf.mxu0
        %v1207 = vadd.f32 %v902, %v1206
        %v1208 = vpop.f32.mrf.mxu0
        %v1209 = vpop.f32.mrf.mxu0
        %v1210 = vadd.f32 %v905, %v1209
        %v1211 = vpop.f32.mrf.mxu0
        %1212 = vmatprep.mubr.bf16.mxu0 %v360
        %1213 = vmatmul.mubr.bf16.gmra.mxu0 %v359
        %v1214 = vpop.f32.mrf.mxu0
        %v1215 = vadd.f32 %v910, %v1214
        %v1216 = vpop.f32.mrf.mxu0
        %v1217 = vpop.f32.mrf.mxu0
        %v1218 = vadd.f32 %v913, %v1217
        %v1219 = vpop.f32.mrf.mxu0
        %1220 = vmatprep.mubr.bf16.mxu0 %v361
        %1221 = vmatmul.mubr.bf16.gmra.mxu0 %v360
        %v1222 = vpop.f32.mrf.mxu0
        %v1223 = vadd.f32 %v918, %v1222
        %v1224 = vpop.f32.mrf.mxu0
        %v1225 = vpop.f32.mrf.mxu0
        %v1226 = vadd.f32 %v921, %v1225
        %v1227 = vpop.f32.mrf.mxu0
        %1228 = vmatprep.mubr.bf16.mxu0 %v362
        %1229 = vmatmul.mubr.bf16.gmra.mxu0 %v361
        %v1230 = vpop.f32.mrf.mxu0
        %v1231 = vadd.f32 %v926, %v1230
        %v1232 = vpop.f32.mrf.mxu0
        %v1233 = vpop.f32.mrf.mxu0
        %v1234 = vadd.f32 %v929, %v1233
        %v1235 = vpop.f32.mrf.mxu0
        %1236 = vmatprep.mubr.bf16.mxu0 %v363
        %1237 = vmatmul.mubr.bf16.gmra.mxu0 %v362
        %v1238 = vpop.f32.mrf.mxu0
        %v1239 = vadd.f32 %v934, %v1238
        %v1240 = vpop.f32.mrf.mxu0
        %v1241 = vpop.f32.mrf.mxu0
        %v1242 = vadd.f32 %v937, %v1241
        %v1243 = vpop.f32.mrf.mxu0
        %1244 = vmatprep.mubr.bf16.mxu0 %v364
        %1245 = vmatmul.mubr.bf16.gmra.mxu0 %v363
        %v1246 = vpop.f32.mrf.mxu0
        %v1247 = vadd.f32 %v942, %v1246
        %v1248 = vpop.f32.mrf.mxu0
        %v1249 = vpop.f32.mrf.mxu0
        %v1250 = vadd.f32 %v945, %v1249
        %v1251 = vpop.f32.mrf.mxu0
        %1252 = vmatprep.mubr.bf16.mxu0 %v365
        %1253 = vmatmul.mubr.bf16.gmra.mxu0 %v364
        %v1254 = vpop.f32.mrf.mxu0
        %v1255 = vadd.f32 %v950, %v1254
        %v1256 = vpop.f32.mrf.mxu0
        %v1257 = vpop.f32.mrf.mxu0
        %v1258 = vadd.f32 %v953, %v1257
        %v1259 = vpop.f32.mrf.mxu0
        %1260 = vmatprep.mubr.bf16.mxu0 %v366
        %1261 = vmatmul.mubr.bf16.gmra.mxu0 %v365
        %v1262 = vpop.f32.mrf.mxu0
        %v1263 = vadd.f32 %v958, %v1262
        %v1264 = vpop.f32.mrf.mxu0
        %v1265 = vpop.f32.mrf.mxu0
        %v1266 = vadd.f32 %v961, %v1265
        %v1267 = vpop.f32.mrf.mxu0
        %1268 = vmatprep.mubr.bf16.mxu0 %v367
        %1269 = vmatmul.mubr.bf16.gmra.mxu0 %v366
        %v1270 = vpop.f32.mrf.mxu0
        %v1271 = vadd.f32 %v966, %v1270
        %v1272 = vpop.f32.mrf.mxu0
        %v1273 = vpop.f32.mrf.mxu0
        %v1274 = vadd.f32 %v969, %v1273
        %v1275 = vpop.f32.mrf.mxu0
        %1276 = vmatprep.mubr.bf16.mxu0 %v368
        %1277 = vmatmul.mubr.bf16.gmra.mxu0 %v367
        %v1278 = vpop.f32.mrf.mxu0
        %v1279 = vadd.f32 %v974, %v1278
        %v1280 = vpop.f32.mrf.mxu0
        %v1281 = vpop.f32.mrf.mxu0
        %v1282 = vadd.f32 %v977, %v1281
        %v1283 = vpop.f32.mrf.mxu0
        %1284 = vmatprep.mubr.bf16.mxu0 %v369
        %1285 = vmatmul.mubr.bf16.gmra.mxu0 %v368
        %v1286 = vpop.f32.mrf.mxu0
        %v1287 = vadd.f32 %v982, %v1286
        %v1288 = vpop.f32.mrf.mxu0
        %v1289 = vpop.f32.mrf.mxu0
        %v1290 = vadd.f32 %v985, %v1289
        %v1291 = vpop.f32.mrf.mxu0
        %1292 = vdwg.mxu0
        %1293 = vmatprep.subr.bf16.mxu0 0
        %1294 = vmatpush1.bf16.msra.mxu0 %v1107
        %1295 = vmatprep.subr.bf16.mxu0 0
        %1296 = vmatpush1.bf16.msra.mxu0 %v1106
        %1297 = vmatprep.subr.bf16.mxu0 0
        %1298 = vmatpush1.bf16.msra.mxu0 %v1105
        %1299 = vmatprep.subr.bf16.mxu0 0
        %1300 = vmatpush1.bf16.msra.mxu0 %v1104
        %1301 = vmatprep.subr.bf16.mxu0 0
        %1302 = vmatpush1.bf16.msra.mxu0 %v1103
        %1303 = vmatprep.subr.bf16.mxu0 0
        %1304 = vmatpush1.bf16.msra.mxu0 %v1102
        %1305 = vmatprep.subr.bf16.mxu0 0
        %1306 = vmatpush1.bf16.msra.mxu0 %v1101
        %1307 = vmatprep.subr.bf16.mxu0 0
        %1308 = vmatpush1.bf16.msra.mxu0 %v1100
        %1309 = vmatprep.subr.bf16.mxu0 0
        %1310 = vmatpush2.bf16.msra.mxu0 0
        %1311 = vmatprep.subr.bf16.mxu0 0
        %1312 = vmatpush2.bf16.msra.mxu0 0
        %1313 = vmatprep.subr.bf16.mxu0 0
        %1314 = vmatpush2.bf16.msra.mxu0 0
        %1315 = vmatprep.subr.bf16.mxu0 0
        %1316 = vmatpush2.bf16.msra.mxu0 0
        %1317 = vmatprep.subr.bf16.mxu0 0
        %1318 = vmatpush2.bf16.msra.mxu0 0
        %1319 = vmatprep.subr.bf16.mxu0 0
        %1320 = vmatpush2.bf16.msra.mxu0 0
        %1321 = vmatprep.subr.bf16.mxu0 0
        %1322 = vmatpush2.bf16.msra.mxu0 0
        %1323 = vmatprep.subr.bf16.mxu0 0
        %1324 = vmatpush2.bf16.msra.mxu0 0
        %1325 = vmatprep.mubr.bf16.mxu0 0
        %1326 = vmatmul.mubr.bf16.gmra.mxu0 %v355
        %v1327 = vpop.f32.mrf.mxu0
        %v1328 = vadd.f32 %v1167, %v1327
        %v1329 = vpop.f32.mrf.mxu0
        %v1330 = vpop.f32.mrf.mxu0
        %v1331 = vadd.f32 %v1170, %v1330
        %v1332 = vpop.f32.mrf.mxu0
        %1333 = vmatprep.mubr.bf16.mxu0 0
        %1334 = vmatmul.mubr.bf16.gmra.mxu0 %v356
        %v1335 = vpop.f32.mrf.mxu0
        %v1336 = vadd.f32 %v1175, %v1335
        %v1337 = vpop.f32.mrf.mxu0
        %v1338 = vpop.f32.mrf.mxu0
        %v1339 = vadd.f32 %v1178, %v1338
        %v1340 = vpop.f32.mrf.mxu0
        %1341 = vmatprep.mubr.bf16.mxu0 0
        %1342 = vmatmul.mubr.bf16.gmra.mxu0 %v357
        %v1343 = vpop.f32.mrf.mxu0
        %v1344 = vadd.f32 %v1183, %v1343
        %v1345 = vpop.f32.mrf.mxu0
        %v1346 = vpop.f32.mrf.mxu0
        %v1347 = vadd.f32 %v1186, %v1346
        %v1348 = vpop.f32.mrf.mxu0
        %1349 = vmatprep.mubr.bf16.mxu0 0
        %1350 = vmatmul.mubr.bf16.gmra.mxu0 %v358
        %v1351 = vpop.f32.mrf.mxu0
        %v1352 = vadd.f32 %v1191, %v1351
        %v1353 = vpop.f32.mrf.mxu0
        %v1354 = vpop.f32.mrf.mxu0
        %v1355 = vadd.f32 %v1194, %v1354
        %v1356 = vpop.f32.mrf.mxu0
        %1357 = vmatprep.mubr.bf16.mxu0 0
        %1358 = vmatmul.mubr.bf16.gmra.mxu0 %v359
        %v1359 = vpop.f32.mrf.mxu0
        %v1360 = vadd.f32 %v1199, %v1359
        %v1361 = vpop.f32.mrf.mxu0
        %v1362 = vpop.f32.mrf.mxu0
        %v1363 = vadd.f32 %v1202, %v1362
        %v1364 = vpop.f32.mrf.mxu0
        %1365 = vmatprep.mubr.bf16.mxu0 0
        %1366 = vmatmul.mubr.bf16.gmra.mxu0 %v360
        %v1367 = vpop.f32.mrf.mxu0
        %v1368 = vadd.f32 %v1207, %v1367
        %v1369 = vpop.f32.mrf.mxu0
        %v1370 = vpop.f32.mrf.mxu0
        %v1371 = vadd.f32 %v1210, %v1370
        %v1372 = vpop.f32.mrf.mxu0
        %1373 = vmatprep.mubr.bf16.mxu0 0
        %1374 = vmatmul.mubr.bf16.gmra.mxu0 %v361
        %v1375 = vpop.f32.mrf.mxu0
        %v1376 = vadd.f32 %v1215, %v1375
        %v1377 = vpop.f32.mrf.mxu0
        %v1378 = vpop.f32.mrf.mxu0
        %v1379 = vadd.f32 %v1218, %v1378
        %v1380 = vpop.f32.mrf.mxu0
        %1381 = vmatprep.mubr.bf16.mxu0 0
        %1382 = vmatmul.mubr.bf16.gmra.mxu0 %v362
        %v1383 = vpop.f32.mrf.mxu0
        %v1384 = vadd.f32 %v1223, %v1383
        %v1385 = vpop.f32.mrf.mxu0
        %v1386 = vpop.f32.mrf.mxu0
        %v1387 = vadd.f32 %v1226, %v1386
        %v1388 = vpop.f32.mrf.mxu0
        %1389 = vmatprep.mubr.bf16.mxu0 0
        %1390 = vmatmul.mubr.bf16.gmra.mxu0 %v363
        %v1391 = vpop.f32.mrf.mxu0
        %v1392 = vadd.f32 %v1231, %v1391
        %v1393 = vpop.f32.mrf.mxu0
        %v1394 = vpop.f32.mrf.mxu0
        %v1395 = vadd.f32 %v1234, %v1394
        %v1396 = vpop.f32.mrf.mxu0
        %1397 = vmatprep.mubr.bf16.mxu0 0
        %1398 = vmatmul.mubr.bf16.gmra.mxu0 %v364
        %v1399 = vpop.f32.mrf.mxu0
        %v1400 = vadd.f32 %v1239, %v1399
        %v1401 = vpop.f32.mrf.mxu0
        %v1402 = vpop.f32.mrf.mxu0
        %v1403 = vadd.f32 %v1242, %v1402
        %v1404 = vpop.f32.mrf.mxu0
        %1405 = vmatprep.mubr.bf16.mxu0 0
        %1406 = vmatmul.mubr.bf16.gmra.mxu0 %v365
        %v1407 = vpop.f32.mrf.mxu0
        %v1408 = vadd.f32 %v1247, %v1407
        %v1409 = vpop.f32.mrf.mxu0
        %v1410 = vpop.f32.mrf.mxu0
        %v1411 = vadd.f32 %v1250, %v1410
        %v1412 = vpop.f32.mrf.mxu0
        %1413 = vmatprep.mubr.bf16.mxu0 0
        %1414 = vmatmul.mubr.bf16.gmra.mxu0 %v366
        %v1415 = vpop.f32.mrf.mxu0
        %v1416 = vadd.f32 %v1255, %v1415
        %v1417 = vpop.f32.mrf.mxu0
        %v1418 = vpop.f32.mrf.mxu0
        %v1419 = vadd.f32 %v1258, %v1418
        %v1420 = vpop.f32.mrf.mxu0
        %1421 = vmatprep.mubr.bf16.mxu0 0
        %1422 = vmatmul.mubr.bf16.gmra.mxu0 %v367
        %v1423 = vpop.f32.mrf.mxu0
        %v1424 = vadd.f32 %v1263, %v1423
        %v1425 = vpop.f32.mrf.mxu0
        %v1426 = vpop.f32.mrf.mxu0
        %v1427 = vadd.f32 %v1266, %v1426
        %v1428 = vpop.f32.mrf.mxu0
        %1429 = vmatprep.mubr.bf16.mxu0 0
        %1430 = vmatmul.mubr.bf16.gmra.mxu0 %v368
        %v1431 = vpop.f32.mrf.mxu0
        %v1432 = vadd.f32 %v1271, %v1431
        %v1433 = vpop.f32.mrf.mxu0
        %v1434 = vpop.f32.mrf.mxu0
        %v1435 = vadd.f32 %v1274, %v1434
        %v1436 = vpop.f32.mrf.mxu0
        %1437 = vmatprep.mubr.bf16.mxu0 0
        %1438 = vmatmul.mubr.bf16.gmra.mxu0 %v369
        %v1439 = vpop.f32.mrf.mxu0
        %v1440 = vadd.f32 %v1279, %v1439
        %v1441 = vpop.f32.mrf.mxu0
        %v1442 = vpop.f32.mrf.mxu0
        %v1443 = vadd.f32 %v1282, %v1442
        %v1444 = vpop.f32.mrf.mxu0
        %1445 = vmatprep.mubr.bf16.mxu0 0
        %1446 = vmatmul.mubr.bf16.gmra.mxu0 %v370
        %v1447 = vpop.f32.mrf.mxu0
        %v1448 = vadd.f32 %v1287, %v1447
        %v1449 = vpop.f32.mrf.mxu0
        %v1450 = vpop.f32.mrf.mxu0
        %v1451 = vadd.f32 %v1290, %v1450
        %v1452 = vpop.f32.mrf.mxu0
        %1453 = vdwg.mxu0
        %v1454 = vld [vmem:[#allocation2 + $0x2] sm:$0xff]
        %v1455 = vld [vmem:[#allocation2 + $0xa] sm:$0xff]
        %v1456 = vld [vmem:[#allocation2 + $0x1a] sm:$0xff]
        %v1457 = vld [vmem:[#allocation2 + $0x22] sm:$0xff]
        %v1458 = vld [vmem:[#allocation2 + $0x32] sm:$0xff]
        %v1459 = vld [vmem:[#allocation2 + $0x3a] sm:$0xff]
        %v1460 = vld [vmem:[#allocation2 + $0x4a] sm:$0xff]
        %v1461 = vld [vmem:[#allocation2 + $0x52] sm:$0xff]
        %v1462 = vld [vmem:[#allocation2 + $0x62] sm:$0xff]
        %v1463 = vld [vmem:[#allocation2 + $0x6a] sm:$0xff]
        %v1464 = vld [vmem:[#allocation2 + $0x7a] sm:$0xff]
        %v1465 = vld [vmem:[#allocation2 + $0x82] sm:$0xff]
        %v1466 = vld [vmem:[#allocation2 + $0x92] sm:$0xff]
        %v1467 = vld [vmem:[#allocation2 + $0x9a] sm:$0xff]
        %v1468 = vld [vmem:[#allocation2 + $0xaa] sm:$0xff]
        %v1469 = vld [vmem:[#allocation2 + $0xb2] sm:$0xff]
        %v1470 = vld [vmem:[#allocation2 + $0xc2] sm:$0xff]
        %v1471 = vld [vmem:[#allocation2 + $0xca] sm:$0xff]
        %v1472 = vld [vmem:[#allocation2 + $0xda] sm:$0xff]
        %v1473 = vld [vmem:[#allocation2 + $0xe2] sm:$0xff]
        %v1474 = vld [vmem:[#allocation2 + $0xf2] sm:$0xff]
        %v1475 = vld [vmem:[#allocation2 + $0xfa] sm:$0xff]
        %v1476 = vld [vmem:[#allocation2 + $0x10a] sm:$0xff]
        %v1477 = vld [vmem:[#allocation2 + $0x112] sm:$0xff]
        %v1478 = vld [vmem:[#allocation2 + $0x122] sm:$0xff]
        %v1479 = vld [vmem:[#allocation2 + $0x12a] sm:$0xff]
        %v1480 = vld [vmem:[#allocation2 + $0x13a] sm:$0xff]
        %v1481 = vld [vmem:[#allocation2 + $0x142] sm:$0xff]
        %v1482 = vld [vmem:[#allocation2 + $0x152] sm:$0xff]
        %v1483 = vld [vmem:[#allocation2 + $0x15a] sm:$0xff]
        %v1484 = vld [vmem:[#allocation2 + $0x16a] sm:$0xff]
        %v1485 = vld [vmem:[#allocation2 + $0x172] sm:$0xff]
        %v1486 = vld [vmem:[#allocation2 + $0x182] sm:$0xff]
        %v1487 = vld [vmem:[#allocation2 + $0x18a] sm:$0xff]
        %v1488 = vld [vmem:[#allocation2 + $0x19a] sm:$0xff]
        %v1489 = vld [vmem:[#allocation2 + $0x1a2] sm:$0xff]
        %v1490 = vpack.c.bf16 %v1455, %v1454
        %v1491 = vpack.c.bf16 %v1457, %v1456
        %v1492 = vpack.c.bf16 %v1459, %v1458
        %v1493 = vpack.c.bf16 %v1461, %v1460
        %v1494 = vpack.c.bf16 %v1463, %v1462
        %v1495 = vpack.c.bf16 %v1465, %v1464
        %v1496 = vpack.c.bf16 %v1467, %v1466
        %v1497 = vpack.c.bf16 %v1469, %v1468
        %v1498 = vpack.c.bf16 %v1471, %v1470
        %v1499 = vpack.c.bf16 %v1473, %v1472
        %v1500 = vpack.c.bf16 %v1475, %v1474
        %v1501 = vpack.c.bf16 %v1477, %v1476
        %v1502 = vpack.c.bf16 %v1479, %v1478
        %v1503 = vpack.c.bf16 %v1481, %v1480
        %v1504 = vpack.c.bf16 %v1483, %v1482
        %v1505 = vpack.c.bf16 %v1485, %v1484
        %v1506 = vpack.c.bf16 %v1487, %v1486
        %v1507 = vpack.c.bf16 %v1489, %v1488
        %s1508 = scalar_lea.vmem [#allocation6], 384
        %v1509 = vld [vmem:[%s1508] sm:$0xf]
        %v1510 = vld [vmem:[%s1508 + $0x4] sm:$0xf]
        %v1511 = vld [vmem:[%s1508 + $0x8] sm:$0xf]
        %v1512 = vld [vmem:[%s1508 + $0xc] sm:$0xf]
        %v1513 = vld [vmem:[%s1508 + $0x10] sm:$0xf]
        %v1514 = vld [vmem:[%s1508 + $0x14] sm:$0xf]
        %v1515 = vld [vmem:[%s1508 + $0x18] sm:$0xf]
        %v1516 = vld [vmem:[%s1508 + $0x1c] sm:$0xf]
        %v1517 = vld [vmem:[%s1508 + $0x20] sm:$0xf]
        %v1518 = vld [vmem:[%s1508 + $0x24] sm:$0xf]
        %v1519 = vld [vmem:[%s1508 + $0x28] sm:$0xf]
        %v1520 = vld [vmem:[%s1508 + $0x2c] sm:$0xf]
        %v1521 = vld [vmem:[%s1508 + $0x30] sm:$0xf]
        %v1522 = vld [vmem:[%s1508 + $0x34] sm:$0xf]
        %v1523 = vld [vmem:[%s1508 + $0x38] sm:$0xf]
        %v1524 = vld [vmem:[%s1508 + $0x3c] sm:$0xf]
        %v1525 = vld [vmem:[%s1508 + $0x40] sm:$0xf]
        %v1526 = vld [vmem:[%s1508 + $0x44] sm:$0xf]
        %v1527 = vld [vmem:[%s1508 + $0x48] sm:$0xf]
        %v1528 = vld [vmem:[%s1508 + $0x4c] sm:$0xf]
        %v1529 = vld [vmem:[%s1508 + $0x50] sm:$0xf]
        %v1530 = vld [vmem:[%s1508 + $0x54] sm:$0xf]
        %v1531 = vld [vmem:[%s1508 + $0x58] sm:$0xf]
        %v1532 = vld [vmem:[%s1508 + $0x5c] sm:$0xf]
        %v1533 = vld [vmem:[%s1508 + $0x60] sm:$0xf]
        %v1534 = vld [vmem:[%s1508 + $0x64] sm:$0xf]
        %v1535 = vld [vmem:[%s1508 + $0x68] sm:$0xf]
        %v1536 = vld [vmem:[%s1508 + $0x6c] sm:$0xf]
        %v1537 = vld [vmem:[%s1508 + $0x70] sm:$0xf]
        %v1538 = vld [vmem:[%s1508 + $0x74] sm:$0xf]
        %v1539 = vld [vmem:[%s1508 + $0x78] sm:$0xf]
        %v1540 = vld [vmem:[%s1508 + $0x7c] sm:$0xf]
        %v1541 = vld [vmem:[%s1508 + $0x80] sm:$0xf]
        %v1542 = vld [vmem:[%s1508 + $0x84] sm:$0xf]
        %v1543 = vld [vmem:[%s1508 + $0x88] sm:$0xf]
        %v1544 = vld [vmem:[%s1508 + $0x8c] sm:$0xf]
        %v1545 = vld [vmem:[%s1508 + $0x90] sm:$0xf]
        %v1546 = vld [vmem:[%s1508 + $0x94] sm:$0xf]
        %v1547 = vld [vmem:[%s1508 + $0x98] sm:$0xf]
        %v1548 = vld [vmem:[%s1508 + $0x9c] sm:$0xf]
        %v1549 = vld [vmem:[%s1508 + $0xa0] sm:$0xf]
        %v1550 = vld [vmem:[%s1508 + $0xa4] sm:$0xf]
        %v1551 = vld [vmem:[%s1508 + $0xa8] sm:$0xf]
        %v1552 = vld [vmem:[%s1508 + $0xac] sm:$0xf]
        %v1553 = vld [vmem:[%s1508 + $0xb0] sm:$0xf]
        %v1554 = vld [vmem:[%s1508 + $0xb4] sm:$0xf]
        %v1555 = vld [vmem:[%s1508 + $0xb8] sm:$0xf]
        %v1556 = vld [vmem:[%s1508 + $0xbc] sm:$0xf]
        %v1605 = vunpack.c.l.b16 %v1509
        %v1606 = vunpack.c.l.b16 %v1510
        %v1607 = vunpack.c.l.b16 %v1511
        %v1608 = vunpack.c.l.b16 %v1512
        %v1609 = vunpack.c.l.b16 %v1513
        %v1610 = vunpack.c.l.b16 %v1514
        %v1611 = vunpack.c.l.b16 %v1515
        %v1612 = vunpack.c.l.b16 %v1516
        %v1613 = vunpack.c.l.b16 %v1517
        %v1614 = vunpack.c.l.b16 %v1518
        %v1615 = vunpack.c.l.b16 %v1519
        %v1616 = vunpack.c.l.b16 %v1520
        %v1617 = vunpack.c.l.b16 %v1521
        %v1618 = vunpack.c.l.b16 %v1522
        %v1619 = vunpack.c.l.b16 %v1523
        %v1620 = vunpack.c.l.b16 %v1524
        %v1621 = vunpack.c.l.b16 %v1525
        %v1622 = vunpack.c.l.b16 %v1526
        %v1623 = vunpack.c.l.b16 %v1527
        %v1624 = vunpack.c.l.b16 %v1528
        %v1625 = vunpack.c.l.b16 %v1529
        %v1626 = vunpack.c.l.b16 %v1530
        %v1627 = vunpack.c.l.b16 %v1531
        %v1628 = vunpack.c.l.b16 %v1532
        %v1629 = vunpack.c.l.b16 %v1533
        %v1630 = vunpack.c.l.b16 %v1534
        %v1631 = vunpack.c.l.b16 %v1535
        %v1632 = vunpack.c.l.b16 %v1536
        %v1633 = vunpack.c.l.b16 %v1537
        %v1634 = vunpack.c.l.b16 %v1538
        %v1635 = vunpack.c.l.b16 %v1539
        %v1636 = vunpack.c.l.b16 %v1540
        %v1637 = vunpack.c.l.b16 %v1541
        %v1638 = vunpack.c.l.b16 %v1542
        %v1639 = vunpack.c.l.b16 %v1543
        %v1640 = vunpack.c.l.b16 %v1544
        %v1641 = vunpack.c.l.b16 %v1545
        %v1642 = vunpack.c.l.b16 %v1546
        %v1643 = vunpack.c.l.b16 %v1547
        %v1644 = vunpack.c.l.b16 %v1548
        %v1645 = vunpack.c.l.b16 %v1549
        %v1646 = vunpack.c.l.b16 %v1550
        %v1647 = vunpack.c.l.b16 %v1551
        %v1648 = vunpack.c.l.b16 %v1552
        %v1649 = vunpack.c.l.b16 %v1553
        %v1650 = vunpack.c.l.b16 %v1554
        %v1651 = vunpack.c.l.b16 %v1555
        %v1652 = vunpack.c.l.b16 %v1556
        %v1653 = vpack.c.b16 %v1606, %v1605
        %v1654 = vpack.c.b16 %v1608, %v1607
        %v1655 = vpack.c.b16 %v1610, %v1609
        %v1656 = vpack.c.b16 %v1612, %v1611
        %v1657 = vpack.c.b16 %v1614, %v1613
        %v1658 = vpack.c.b16 %v1616, %v1615
        %v1659 = vpack.c.b16 %v1618, %v1617
        %v1660 = vpack.c.b16 %v1620, %v1619
        %v1661 = vpack.c.b16 %v1622, %v1621
        %v1662 = vpack.c.b16 %v1624, %v1623
        %v1663 = vpack.c.b16 %v1626, %v1625
        %v1664 = vpack.c.b16 %v1628, %v1627
        %v1665 = vpack.c.b16 %v1630, %v1629
        %v1666 = vpack.c.b16 %v1632, %v1631
        %v1667 = vpack.c.b16 %v1634, %v1633
        %v1668 = vpack.c.b16 %v1636, %v1635
        %v1669 = vpack.c.b16 %v1638, %v1637
        %v1670 = vpack.c.b16 %v1640, %v1639
        %v1671 = vpack.c.b16 %v1642, %v1641
        %v1672 = vpack.c.b16 %v1644, %v1643
        %v1673 = vpack.c.b16 %v1646, %v1645
        %v1674 = vpack.c.b16 %v1648, %v1647
        %v1675 = vpack.c.b16 %v1650, %v1649
        %v1676 = vpack.c.b16 %v1652, %v1651
        %1701 = vmatprep.subr.bf16.mxu0 0
        %1702 = vmatpush1.bf16.msra.mxu0 %v1660
        %1703 = vmatprep.subr.bf16.mxu0 0
        %1704 = vmatpush1.bf16.msra.mxu0 %v1659
        %1705 = vmatprep.subr.bf16.mxu0 0
        %1706 = vmatpush1.bf16.msra.mxu0 %v1658
        %1707 = vmatprep.subr.bf16.mxu0 0
        %1708 = vmatpush1.bf16.msra.mxu0 %v1657
        %1709 = vmatprep.subr.bf16.mxu0 0
        %1710 = vmatpush1.bf16.msra.mxu0 %v1656
        %1711 = vmatprep.subr.bf16.mxu0 0
        %1712 = vmatpush1.bf16.msra.mxu0 %v1655
        %1713 = vmatprep.subr.bf16.mxu0 0
        %1714 = vmatpush1.bf16.msra.mxu0 %v1654
        %1715 = vmatprep.subr.bf16.mxu0 0
        %1716 = vmatpush1.bf16.msra.mxu0 %v1653
        %1717 = vmatprep.subr.bf16.mxu0 0
        %1718 = vmatpush2.bf16.msra.mxu0 %v1668
        %1719 = vmatprep.subr.bf16.mxu0 0
        %1720 = vmatpush2.bf16.msra.mxu0 %v1667
        %1721 = vmatprep.subr.bf16.mxu0 0
        %1722 = vmatpush2.bf16.msra.mxu0 %v1666
        %1723 = vmatprep.subr.bf16.mxu0 0
        %1724 = vmatpush2.bf16.msra.mxu0 %v1665
        %1725 = vmatprep.subr.bf16.mxu0 0
        %1726 = vmatpush2.bf16.msra.mxu0 %v1664
        %1727 = vmatprep.subr.bf16.mxu0 0
        %1728 = vmatpush2.bf16.msra.mxu0 %v1663
        %1729 = vmatprep.subr.bf16.mxu0 0
        %1730 = vmatpush2.bf16.msra.mxu0 %v1662
        %1731 = vmatprep.subr.bf16.mxu0 0
        %1732 = vmatpush2.bf16.msra.mxu0 %v1661
        %1733 = vmatprep.mubr.bf16.mxu0 %v1491
        %1734 = vmatmul.mubr.bf16.gmra.mxu0 %v1490
        %v1735 = vpop.f32.mrf.mxu0
        %v1736 = vadd.f32 0.0, %v1735
        %v1737 = vpop.f32.mrf.mxu0
        %v1738 = vpop.f32.mrf.mxu0
        %v1739 = vadd.f32 0.0, %v1738
        %v1740 = vpop.f32.mrf.mxu0
        %1741 = vmatprep.mubr.bf16.mxu0 %v1492
        %1742 = vmatmul.mubr.bf16.gmra.mxu0 %v1491
        %v1743 = vpop.f32.mrf.mxu0
        %v1744 = vadd.f32 0.0, %v1743
        %v1745 = vpop.f32.mrf.mxu0
        %v1746 = vpop.f32.mrf.mxu0
        %v1747 = vadd.f32 0.0, %v1746
        %v1748 = vpop.f32.mrf.mxu0
        %1749 = vmatprep.mubr.bf16.mxu0 %v1493
        %1750 = vmatmul.mubr.bf16.gmra.mxu0 %v1492
        %v1751 = vpop.f32.mrf.mxu0
        %v1752 = vadd.f32 0.0, %v1751
        %v1753 = vpop.f32.mrf.mxu0
        %v1754 = vpop.f32.mrf.mxu0
        %v1755 = vadd.f32 0.0, %v1754
        %v1756 = vpop.f32.mrf.mxu0
        %1757 = vmatprep.mubr.bf16.mxu0 %v1494
        %1758 = vmatmul.mubr.bf16.gmra.mxu0 %v1493
        %v1759 = vpop.f32.mrf.mxu0
        %v1760 = vadd.f32 0.0, %v1759
        %v1761 = vpop.f32.mrf.mxu0
        %v1762 = vpop.f32.mrf.mxu0
        %v1763 = vadd.f32 0.0, %v1762
        %v1764 = vpop.f32.mrf.mxu0
        %1765 = vmatprep.mubr.bf16.mxu0 %v1495
        %1766 = vmatmul.mubr.bf16.gmra.mxu0 %v1494
        %v1767 = vpop.f32.mrf.mxu0
        %v1768 = vadd.f32 0.0, %v1767
        %v1769 = vpop.f32.mrf.mxu0
        %v1770 = vpop.f32.mrf.mxu0
        %v1771 = vadd.f32 0.0, %v1770
        %v1772 = vpop.f32.mrf.mxu0
        %1773 = vmatprep.mubr.bf16.mxu0 %v1496
        %1774 = vmatmul.mubr.bf16.gmra.mxu0 %v1495
        %v1775 = vpop.f32.mrf.mxu0
        %v1776 = vadd.f32 0.0, %v1775
        %v1777 = vpop.f32.mrf.mxu0
        %v1778 = vpop.f32.mrf.mxu0
        %v1779 = vadd.f32 0.0, %v1778
        %v1780 = vpop.f32.mrf.mxu0
        %1781 = vmatprep.mubr.bf16.mxu0 %v1497
        %1782 = vmatmul.mubr.bf16.gmra.mxu0 %v1496
        %v1783 = vpop.f32.mrf.mxu0
        %v1784 = vadd.f32 0.0, %v1783
        %v1785 = vpop.f32.mrf.mxu0
        %v1786 = vpop.f32.mrf.mxu0
        %v1787 = vadd.f32 0.0, %v1786
        %v1788 = vpop.f32.mrf.mxu0
        %1789 = vmatprep.mubr.bf16.mxu0 %v1498
        %1790 = vmatmul.mubr.bf16.gmra.mxu0 %v1497
        %v1791 = vpop.f32.mrf.mxu0
        %v1792 = vadd.f32 0.0, %v1791
        %v1793 = vpop.f32.mrf.mxu0
        %v1794 = vpop.f32.mrf.mxu0
        %v1795 = vadd.f32 0.0, %v1794
        %v1796 = vpop.f32.mrf.mxu0
        %1797 = vmatprep.mubr.bf16.mxu0 %v1499
        %1798 = vmatmul.mubr.bf16.gmra.mxu0 %v1498
        %v1799 = vpop.f32.mrf.mxu0
        %v1800 = vadd.f32 0.0, %v1799
        %v1801 = vpop.f32.mrf.mxu0
        %v1802 = vpop.f32.mrf.mxu0
        %v1803 = vadd.f32 0.0, %v1802
        %v1804 = vpop.f32.mrf.mxu0
        %1805 = vmatprep.mubr.bf16.mxu0 %v1500
        %1806 = vmatmul.mubr.bf16.gmra.mxu0 %v1499
        %v1807 = vpop.f32.mrf.mxu0
        %v1808 = vadd.f32 0.0, %v1807
        %v1809 = vpop.f32.mrf.mxu0
        %v1810 = vpop.f32.mrf.mxu0
        %v1811 = vadd.f32 0.0, %v1810
        %v1812 = vpop.f32.mrf.mxu0
        %1813 = vmatprep.mubr.bf16.mxu0 %v1501
        %1814 = vmatmul.mubr.bf16.gmra.mxu0 %v1500
        %v1815 = vpop.f32.mrf.mxu0
        %v1816 = vadd.f32 0.0, %v1815
        %v1817 = vpop.f32.mrf.mxu0
        %v1818 = vpop.f32.mrf.mxu0
        %v1819 = vadd.f32 0.0, %v1818
        %v1820 = vpop.f32.mrf.mxu0
        %1821 = vmatprep.mubr.bf16.mxu0 %v1502
        %1822 = vmatmul.mubr.bf16.gmra.mxu0 %v1501
        %v1823 = vpop.f32.mrf.mxu0
        %v1824 = vadd.f32 0.0, %v1823
        %v1825 = vpop.f32.mrf.mxu0
        %v1826 = vpop.f32.mrf.mxu0
        %v1827 = vadd.f32 0.0, %v1826
        %v1828 = vpop.f32.mrf.mxu0
        %1829 = vmatprep.mubr.bf16.mxu0 %v1503
        %1830 = vmatmul.mubr.bf16.gmra.mxu0 %v1502
        %v1831 = vpop.f32.mrf.mxu0
        %v1832 = vadd.f32 0.0, %v1831
        %v1833 = vpop.f32.mrf.mxu0
        %v1834 = vpop.f32.mrf.mxu0
        %v1835 = vadd.f32 0.0, %v1834
        %v1836 = vpop.f32.mrf.mxu0
        %1837 = vmatprep.mubr.bf16.mxu0 %v1504
        %1838 = vmatmul.mubr.bf16.gmra.mxu0 %v1503
        %v1839 = vpop.f32.mrf.mxu0
        %v1840 = vadd.f32 0.0, %v1839
        %v1841 = vpop.f32.mrf.mxu0
        %v1842 = vpop.f32.mrf.mxu0
        %v1843 = vadd.f32 0.0, %v1842
        %v1844 = vpop.f32.mrf.mxu0
        %1845 = vmatprep.mubr.bf16.mxu0 %v1505
        %1846 = vmatmul.mubr.bf16.gmra.mxu0 %v1504
        %v1847 = vpop.f32.mrf.mxu0
        %v1848 = vadd.f32 0.0, %v1847
        %v1849 = vpop.f32.mrf.mxu0
        %v1850 = vpop.f32.mrf.mxu0
        %v1851 = vadd.f32 0.0, %v1850
        %v1852 = vpop.f32.mrf.mxu0
        %1853 = vmatprep.mubr.bf16.mxu0 %v1506
        %1854 = vmatmul.mubr.bf16.gmra.mxu0 %v1505
        %v1855 = vpop.f32.mrf.mxu0
        %v1856 = vadd.f32 0.0, %v1855
        %v1857 = vpop.f32.mrf.mxu0
        %v1858 = vpop.f32.mrf.mxu0
        %v1859 = vadd.f32 0.0, %v1858
        %v1860 = vpop.f32.mrf.mxu0
        %1861 = vdwg.mxu0
        %1862 = vmatprep.subr.bf16.mxu0 0
        %1863 = vmatpush1.bf16.msra.mxu0 %v1676
        %1864 = vmatprep.subr.bf16.mxu0 0
        %1865 = vmatpush1.bf16.msra.mxu0 %v1675
        %1866 = vmatprep.subr.bf16.mxu0 0
        %1867 = vmatpush1.bf16.msra.mxu0 %v1674
        %1868 = vmatprep.subr.bf16.mxu0 0
        %1869 = vmatpush1.bf16.msra.mxu0 %v1673
        %1870 = vmatprep.subr.bf16.mxu0 0
        %1871 = vmatpush1.bf16.msra.mxu0 %v1672
        %1872 = vmatprep.subr.bf16.mxu0 0
        %1873 = vmatpush1.bf16.msra.mxu0 %v1671
        %1874 = vmatprep.subr.bf16.mxu0 0
        %1875 = vmatpush1.bf16.msra.mxu0 %v1670
        %1876 = vmatprep.subr.bf16.mxu0 0
        %1877 = vmatpush1.bf16.msra.mxu0 %v1669
        %1878 = vmatprep.subr.bf16.mxu0 0
        %1879 = vmatpush2.bf16.msra.mxu0 0
        %1880 = vmatprep.subr.bf16.mxu0 0
        %1881 = vmatpush2.bf16.msra.mxu0 0
        %1882 = vmatprep.subr.bf16.mxu0 0
        %1883 = vmatpush2.bf16.msra.mxu0 0
        %1884 = vmatprep.subr.bf16.mxu0 0
        %1885 = vmatpush2.bf16.msra.mxu0 0
        %1886 = vmatprep.subr.bf16.mxu0 0
        %1887 = vmatpush2.bf16.msra.mxu0 0
        %1888 = vmatprep.subr.bf16.mxu0 0
        %1889 = vmatpush2.bf16.msra.mxu0 0
        %1890 = vmatprep.subr.bf16.mxu0 0
        %1891 = vmatpush2.bf16.msra.mxu0 0
        %1892 = vmatprep.subr.bf16.mxu0 0
        %1893 = vmatpush2.bf16.msra.mxu0 0
        %1894 = vmatprep.mubr.bf16.mxu0 0
        %1895 = vmatmul.mubr.bf16.gmra.mxu0 %v1492
        %v1896 = vpop.f32.mrf.mxu0
        %v1897 = vadd.f32 %v1736, %v1896
        %v1898 = vpop.f32.mrf.mxu0
        %v1899 = vpop.f32.mrf.mxu0
        %v1900 = vadd.f32 %v1739, %v1899
        %v1901 = vpop.f32.mrf.mxu0
        %1902 = vmatprep.mubr.bf16.mxu0 0
        %1903 = vmatmul.mubr.bf16.gmra.mxu0 %v1493
        %v1904 = vpop.f32.mrf.mxu0
        %v1905 = vadd.f32 %v1744, %v1904
        %v1906 = vpop.f32.mrf.mxu0
        %v1907 = vpop.f32.mrf.mxu0
        %v1908 = vadd.f32 %v1747, %v1907
        %v1909 = vpop.f32.mrf.mxu0
        %1910 = vmatprep.mubr.bf16.mxu0 0
        %1911 = vmatmul.mubr.bf16.gmra.mxu0 %v1494
        %v1912 = vpop.f32.mrf.mxu0
        %v1913 = vadd.f32 %v1752, %v1912
        %v1914 = vpop.f32.mrf.mxu0
        %v1915 = vpop.f32.mrf.mxu0
        %v1916 = vadd.f32 %v1755, %v1915
        %v1917 = vpop.f32.mrf.mxu0
        %1918 = vmatprep.mubr.bf16.mxu0 0
        %1919 = vmatmul.mubr.bf16.gmra.mxu0 %v1495
        %v1920 = vpop.f32.mrf.mxu0
        %v1921 = vadd.f32 %v1760, %v1920
        %v1922 = vpop.f32.mrf.mxu0
        %v1923 = vpop.f32.mrf.mxu0
        %v1924 = vadd.f32 %v1763, %v1923
        %v1925 = vpop.f32.mrf.mxu0
        %1926 = vmatprep.mubr.bf16.mxu0 0
        %1927 = vmatmul.mubr.bf16.gmra.mxu0 %v1496
        %v1928 = vpop.f32.mrf.mxu0
        %v1929 = vadd.f32 %v1768, %v1928
        %v1930 = vpop.f32.mrf.mxu0
        %v1931 = vpop.f32.mrf.mxu0
        %v1932 = vadd.f32 %v1771, %v1931
        %v1933 = vpop.f32.mrf.mxu0
        %1934 = vmatprep.mubr.bf16.mxu0 0
        %1935 = vmatmul.mubr.bf16.gmra.mxu0 %v1497
        %v1936 = vpop.f32.mrf.mxu0
        %v1937 = vadd.f32 %v1776, %v1936
        %v1938 = vpop.f32.mrf.mxu0
        %v1939 = vpop.f32.mrf.mxu0
        %v1940 = vadd.f32 %v1779, %v1939
        %v1941 = vpop.f32.mrf.mxu0
        %1942 = vmatprep.mubr.bf16.mxu0 0
        %1943 = vmatmul.mubr.bf16.gmra.mxu0 %v1498
        %v1944 = vpop.f32.mrf.mxu0
        %v1945 = vadd.f32 %v1784, %v1944
        %v1946 = vpop.f32.mrf.mxu0
        %v1947 = vpop.f32.mrf.mxu0
        %v1948 = vadd.f32 %v1787, %v1947
        %v1949 = vpop.f32.mrf.mxu0
        %1950 = vmatprep.mubr.bf16.mxu0 0
        %1951 = vmatmul.mubr.bf16.gmra.mxu0 %v1499
        %v1952 = vpop.f32.mrf.mxu0
        %v1953 = vadd.f32 %v1792, %v1952
        %v1954 = vpop.f32.mrf.mxu0
        %v1955 = vpop.f32.mrf.mxu0
        %v1956 = vadd.f32 %v1795, %v1955
        %v1957 = vpop.f32.mrf.mxu0
        %1958 = vmatprep.mubr.bf16.mxu0 0
        %1959 = vmatmul.mubr.bf16.gmra.mxu0 %v1500
        %v1960 = vpop.f32.mrf.mxu0
        %v1961 = vadd.f32 %v1800, %v1960
        %v1962 = vpop.f32.mrf.mxu0
        %v1963 = vpop.f32.mrf.mxu0
        %v1964 = vadd.f32 %v1803, %v1963
        %v1965 = vpop.f32.mrf.mxu0
        %1966 = vmatprep.mubr.bf16.mxu0 0
        %1967 = vmatmul.mubr.bf16.gmra.mxu0 %v1501
        %v1968 = vpop.f32.mrf.mxu0
        %v1969 = vadd.f32 %v1808, %v1968
        %v1970 = vpop.f32.mrf.mxu0
        %v1971 = vpop.f32.mrf.mxu0
        %v1972 = vadd.f32 %v1811, %v1971
        %v1973 = vpop.f32.mrf.mxu0
        %1974 = vmatprep.mubr.bf16.mxu0 0
        %1975 = vmatmul.mubr.bf16.gmra.mxu0 %v1502
        %v1976 = vpop.f32.mrf.mxu0
        %v1977 = vadd.f32 %v1816, %v1976
        %v1978 = vpop.f32.mrf.mxu0
        %v1979 = vpop.f32.mrf.mxu0
        %v1980 = vadd.f32 %v1819, %v1979
        %v1981 = vpop.f32.mrf.mxu0
        %1982 = vmatprep.mubr.bf16.mxu0 0
        %1983 = vmatmul.mubr.bf16.gmra.mxu0 %v1503
        %v1984 = vpop.f32.mrf.mxu0
        %v1985 = vadd.f32 %v1824, %v1984
        %v1986 = vpop.f32.mrf.mxu0
        %v1987 = vpop.f32.mrf.mxu0
        %v1988 = vadd.f32 %v1827, %v1987
        %v1989 = vpop.f32.mrf.mxu0
        %1990 = vmatprep.mubr.bf16.mxu0 0
        %1991 = vmatmul.mubr.bf16.gmra.mxu0 %v1504
        %v1992 = vpop.f32.mrf.mxu0
        %v1993 = vadd.f32 %v1832, %v1992
        %v1994 = vpop.f32.mrf.mxu0
        %v1995 = vpop.f32.mrf.mxu0
        %v1996 = vadd.f32 %v1835, %v1995
        %v1997 = vpop.f32.mrf.mxu0
        %1998 = vmatprep.mubr.bf16.mxu0 0
        %1999 = vmatmul.mubr.bf16.gmra.mxu0 %v1505
        %v2000 = vpop.f32.mrf.mxu0
        %v2001 = vadd.f32 %v1840, %v2000
        %v2002 = vpop.f32.mrf.mxu0
        %v2003 = vpop.f32.mrf.mxu0
        %v2004 = vadd.f32 %v1843, %v2003
        %v2005 = vpop.f32.mrf.mxu0
        %2006 = vmatprep.mubr.bf16.mxu0 0
        %2007 = vmatmul.mubr.bf16.gmra.mxu0 %v1506
        %v2008 = vpop.f32.mrf.mxu0
        %v2009 = vadd.f32 %v1848, %v2008
        %v2010 = vpop.f32.mrf.mxu0
        %v2011 = vpop.f32.mrf.mxu0
        %v2012 = vadd.f32 %v1851, %v2011
        %v2013 = vpop.f32.mrf.mxu0
        %2014 = vmatprep.mubr.bf16.mxu0 0
        %2015 = vmatmul.mubr.bf16.gmra.mxu0 %v1507
        %v2016 = vpop.f32.mrf.mxu0
        %v2017 = vadd.f32 %v1856, %v2016
        %v2018 = vpop.f32.mrf.mxu0
        %v2019 = vpop.f32.mrf.mxu0
        %v2020 = vadd.f32 %v1859, %v2019
        %v2021 = vpop.f32.mrf.mxu0
        %2022 = vdwg.mxu0
        %v2023 = vadd.f32 %v1328, %v1897
        %v2024 = vadd.f32 %v1331, %v1900
        %v2025 = vadd.f32 %v1336, %v1905
        %v2026 = vadd.f32 %v1339, %v1908
        %v2027 = vadd.f32 %v1344, %v1913
        %v2028 = vadd.f32 %v1347, %v1916
        %v2029 = vadd.f32 %v1352, %v1921
        %v2030 = vadd.f32 %v1355, %v1924
        %v2031 = vadd.f32 %v1360, %v1929
        %v2032 = vadd.f32 %v1363, %v1932
        %v2033 = vadd.f32 %v1368, %v1937
        %v2034 = vadd.f32 %v1371, %v1940
        %v2035 = vadd.f32 %v1376, %v1945
        %v2036 = vadd.f32 %v1379, %v1948
        %v2037 = vadd.f32 %v1384, %v1953
        %v2038 = vadd.f32 %v1387, %v1956
        %v2039 = vadd.f32 %v1392, %v1961
        %v2040 = vadd.f32 %v1395, %v1964
        %v2041 = vadd.f32 %v1400, %v1969
        %v2042 = vadd.f32 %v1403, %v1972
        %v2043 = vadd.f32 %v1408, %v1977
        %v2044 = vadd.f32 %v1411, %v1980
        %v2045 = vadd.f32 %v1416, %v1985
        %v2046 = vadd.f32 %v1419, %v1988
        %v2047 = vadd.f32 %v1424, %v1993
        %v2048 = vadd.f32 %v1427, %v1996
        %v2049 = vadd.f32 %v1432, %v2001
        %v2050 = vadd.f32 %v1435, %v2004
        %v2051 = vadd.f32 %v1440, %v2009
        %v2052 = vadd.f32 %v1443, %v2012
        %v2053 = vadd.f32 %v1448, %v2017
        %v2054 = vadd.f32 %v1451, %v2020
        %2055 = vst [vmem:[%s200] sm:$0xff] %v2023
        %2056 = vst [vmem:[%s200 + $0x8] sm:$0xff] %v2024
        %2057 = vst [vmem:[%s200 + $0x10] sm:$0xff] %v2025
        %2058 = vst [vmem:[%s200 + $0x18] sm:$0xff] %v2026
        %2059 = vst [vmem:[%s200 + $0x20] sm:$0xff] %v2027
        %2060 = vst [vmem:[%s200 + $0x28] sm:$0xff] %v2028
        %2061 = vst [vmem:[%s200 + $0x30] sm:$0xff] %v2029
        %2062 = vst [vmem:[%s200 + $0x38] sm:$0xff] %v2030
        %2063 = vst [vmem:[%s200 + $0x40] sm:$0xff] %v2031
        %2064 = vst [vmem:[%s200 + $0x48] sm:$0xff] %v2032
        %2065 = vst [vmem:[%s200 + $0x50] sm:$0xff] %v2033
        %2066 = vst [vmem:[%s200 + $0x58] sm:$0xff] %v2034
        %2067 = vst [vmem:[%s200 + $0x60] sm:$0xff] %v2035
        %2068 = vst [vmem:[%s200 + $0x68] sm:$0xff] %v2036
        %2069 = vst [vmem:[%s200 + $0x70] sm:$0xff] %v2037
        %2070 = vst [vmem:[%s200 + $0x78] sm:$0xff] %v2038
        %2071 = vst [vmem:[%s200 + $0x80] sm:$0xff] %v2039
        %2072 = vst [vmem:[%s200 + $0x88] sm:$0xff] %v2040
        %2073 = vst [vmem:[%s200 + $0x90] sm:$0xff] %v2041
        %2074 = vst [vmem:[%s200 + $0x98] sm:$0xff] %v2042
        %2075 = vst [vmem:[%s200 + $0xa0] sm:$0xff] %v2043
        %2076 = vst [vmem:[%s200 + $0xa8] sm:$0xff] %v2044
        %2077 = vst [vmem:[%s200 + $0xb0] sm:$0xff] %v2045
        %2078 = vst [vmem:[%s200 + $0xb8] sm:$0xff] %v2046
        %2079 = vst [vmem:[%s200 + $0xc0] sm:$0xff] %v2047
        %2080 = vst [vmem:[%s200 + $0xc8] sm:$0xff] %v2048
        %2081 = vst [vmem:[%s200 + $0xd0] sm:$0xff] %v2049
        %2082 = vst [vmem:[%s200 + $0xd8] sm:$0xff] %v2050
        %2083 = vst [vmem:[%s200 + $0xe0] sm:$0xff] %v2051
        %2084 = vst [vmem:[%s200 + $0xe8] sm:$0xff] %v2052
        %2085 = vst [vmem:[%s200 + $0xf0] sm:$0xff] %v2053
        %2086 = vst [vmem:[%s200 + $0xf8] sm:$0xff] %v2054
        %v2087 = vld [vmem:[#allocation9] sm:$0x3]
        %v2088 = vadd.f32 %v2023, %v2024
        %v2089 = vadd.f32 %v2088, %v2025
        %v2090 = vadd.f32 %v2089, %v2026
        %v2091 = vadd.f32 %v2090, %v2027
        %v2092 = vadd.f32 %v2091, %v2028
        %v2093 = vadd.f32 %v2092, %v2029
        %v2094 = vadd.f32 %v2093, %v2030
        %v2095 = vadd.f32 %v2094, %v2031
        %v2096 = vadd.f32 %v2095, %v2032
        %v2097 = vadd.f32 %v2096, %v2033
        %v2098 = vadd.f32 %v2097, %v2034
        %v2099 = vadd.f32 %v2098, %v2035
        %v2100 = vadd.f32 %v2099, %v2036
        %v2101 = vadd.f32 %v2100, %v2037
        %v2102 = vadd.f32 %v2101, %v2038
        %v2103 = vadd.f32 %v2102, %v2039
        %v2104 = vadd.f32 %v2103, %v2040
        %v2105 = vadd.f32 %v2104, %v2041
        %v2106 = vadd.f32 %v2105, %v2042
        %v2107 = vadd.f32 %v2106, %v2043
        %v2108 = vadd.f32 %v2107, %v2044
        %v2109 = vadd.f32 %v2108, %v2045
        %v2110 = vadd.f32 %v2109, %v2046
        %v2111 = vadd.f32 %v2110, %v2047
        %v2112 = vadd.f32 %v2111, %v2048
        %v2113 = vadd.f32 %v2112, %v2049
        %v2114 = vadd.f32 %v2113, %v2050
        %v2115 = vadd.f32 %v2114, %v2051
        %v2116 = vadd.f32 %v2115, %v2052
        %v2117 = vadd.f32 %v2116, %v2053
        %v2118 = vadd.f32 %v2117, %v2054
        %v2119 = vrot.slane %v2118, 4
        %v2120 = vadd.f32 %v2118, %v2119
        %v2121 = vrot.slane %v2120, 2
        %v2122 = vadd.f32 %v2120, %v2121
        %v2123 = vrot.slane %v2122, 1
        %v2124 = vadd.f32 %v2122, %v2123
        %v2125 = vmul.f32 %v2023, %v2023
        %v2126 = vmul.f32 %v2024, %v2024
        %v2127 = vmul.f32 %v2025, %v2025
        %v2128 = vmul.f32 %v2026, %v2026
        %v2129 = vmul.f32 %v2027, %v2027
        %v2130 = vmul.f32 %v2028, %v2028
        %v2131 = vmul.f32 %v2029, %v2029
        %v2132 = vmul.f32 %v2030, %v2030
        %v2133 = vmul.f32 %v2031, %v2031
        %v2134 = vmul.f32 %v2032, %v2032
        %v2135 = vmul.f32 %v2033, %v2033
        %v2136 = vmul.f32 %v2034, %v2034
        %v2137 = vmul.f32 %v2035, %v2035
        %v2138 = vmul.f32 %v2036, %v2036
        %v2139 = vmul.f32 %v2037, %v2037
        %v2140 = vmul.f32 %v2038, %v2038
        %v2141 = vmul.f32 %v2039, %v2039
        %v2142 = vmul.f32 %v2040, %v2040
        %v2143 = vmul.f32 %v2041, %v2041
        %v2144 = vmul.f32 %v2042, %v2042
        %v2145 = vmul.f32 %v2043, %v2043
        %v2146 = vmul.f32 %v2044, %v2044
        %v2147 = vmul.f32 %v2045, %v2045
        %v2148 = vmul.f32 %v2046, %v2046
        %v2149 = vmul.f32 %v2047, %v2047
        %v2150 = vmul.f32 %v2048, %v2048
        %v2151 = vmul.f32 %v2049, %v2049
        %v2152 = vmul.f32 %v2050, %v2050
        %v2153 = vmul.f32 %v2051, %v2051
        %v2154 = vmul.f32 %v2052, %v2052
        %v2155 = vmul.f32 %v2053, %v2053
        %v2156 = vmul.f32 %v2054, %v2054
        %v2157 = vadd.f32 %v2125, %v2126
        %v2158 = vadd.f32 %v2157, %v2127
        %v2159 = vadd.f32 %v2158, %v2128
        %v2160 = vadd.f32 %v2159, %v2129
        %v2161 = vadd.f32 %v2160, %v2130
        %v2162 = vadd.f32 %v2161, %v2131
        %v2163 = vadd.f32 %v2162, %v2132
        %v2164 = vadd.f32 %v2163, %v2133
        %v2165 = vadd.f32 %v2164, %v2134
        %v2166 = vadd.f32 %v2165, %v2135
        %v2167 = vadd.f32 %v2166, %v2136
        %v2168 = vadd.f32 %v2167, %v2137
        %v2169 = vadd.f32 %v2168, %v2138
        %v2170 = vadd.f32 %v2169, %v2139
        %v2171 = vadd.f32 %v2170, %v2140
        %v2172 = vadd.f32 %v2171, %v2141
        %v2173 = vadd.f32 %v2172, %v2142
        %v2174 = vadd.f32 %v2173, %v2143
        %v2175 = vadd.f32 %v2174, %v2144
        %v2176 = vadd.f32 %v2175, %v2145
        %v2177 = vadd.f32 %v2176, %v2146
        %v2178 = vadd.f32 %v2177, %v2147
        %v2179 = vadd.f32 %v2178, %v2148
        %v2180 = vadd.f32 %v2179, %v2149
        %v2181 = vadd.f32 %v2180, %v2150
        %v2182 = vadd.f32 %v2181, %v2151
        %v2183 = vadd.f32 %v2182, %v2152
        %v2184 = vadd.f32 %v2183, %v2153
        %v2185 = vadd.f32 %v2184, %v2154
        %v2186 = vadd.f32 %v2185, %v2155
        %v2187 = vadd.f32 %v2186, %v2156
        %v2188 = vrot.slane %v2187, 4
        %v2189 = vadd.f32 %v2187, %v2188
        %v2190 = vrot.slane %v2189, 2
        %v2191 = vadd.f32 %v2189, %v2190
        %v2192 = vrot.slane %v2191, 1
        %v2193 = vadd.f32 %v2191, %v2192
        %vm2194 = vcmask 1040384
        %v2195 = vsel %vm2194, %v2124, %v2193
        %v2196 = vadd.f32 %v2087, %v2195
        %2197 = vst [vmem:[#allocation9] sm:$0x3] %v2196
        %s2198 = sand.u32 %s78, 1
        %s2199 = scalar_lea.sflag [#allocation5], %s2198
        %s2200 = sand.u32 %s78, 1
        %s2201 = smul.addr %s2200, 256
        %s2202 = scalar_lea.vmem [#allocation8], %s2201
        // Predicated region
        $region41: #{tpu_custom_call.1} parent=27 // pred_check
          %p2203 = pneg %p88
        $region42: #{tpu_custom_call.1} parent=27 // pred_check_branch
          %2205 = sbr.rel (%p2203) target = $region44
        $region43: #{tpu_custom_call.1} parent=27 // pred_region
          %s2207 = ssub.s32 4096, 4096
          %2208 = vsyncadd %s2199, %s2207
          %s2209 = smul.addr %s23, 32
          %s2210 = smul.addr %s2209, 128
          %s2211 = scalar_lea.hbm %s2, %s2210
          %s2212 = sshll.u32 %s2202, 4
          %s2213 = int_to_ptr.vmem [resolvable:$true] %s2212
          %2218 = dma.vmem_to_hbm [thread:$0]  %s2213, 4096, %s2211, %s2199, 128, 128, 8
        $region44: #{tpu_custom_call.1} parent=27 // pred_fallthru
          _
        // Predicated region
        $region45: #{tpu_custom_call.1} parent=27 // pred_check
          %p2219 = pneg %p109
        $region46: #{tpu_custom_call.1} parent=27 // pred_check_branch
          %2221 = sbr.rel (%p2219) target = $region48
        $region47: #{tpu_custom_call.1} parent=27 // pred_region
          %s2223 = ssub.s32 32, 32
          %2224 = vsyncadd [#allocation10], %s2223
          %s2226 = sshll.u32 [#allocation9], 4
          %s2227 = int_to_ptr.vmem [resolvable:$true] %s2226
          %2229 = dma.vmem_to_hbm [thread:$0]  %s2227, 32, %s3, [#allocation10]
        $region48: #{tpu_custom_call.1} parent=27 // pred_fallthru
          _
        // Predicated region
        $region49: #{tpu_custom_call.1} parent=27 // pred_check
          %p2230 = pneg %p109
        $region50: #{tpu_custom_call.1} parent=27 // pred_check_branch
          %2232 = sbr.rel (%p2230) target = $region52
        $region51: #{tpu_custom_call.1} parent=27 // pred_region
          %2233 = dma.done [#allocation10], 32
        $region52: #{tpu_custom_call.1} parent=27 // pred_fallthru
          _
      $region28: #{tpu_custom_call.1} parent=5 // pred_fallthru
        _
      %p2234 = scmp.le.s32.totalorder 2, %s18
      // Predicated region
      $region53: #{tpu_custom_call.1} parent=5 // pred_check
        %p2235 = pneg %p2234
      $region54: #{tpu_custom_call.1} parent=5 // pred_check_branch
        %2237 = sbr.rel (%p2235) target = $region56
      $region55: #{tpu_custom_call.1} parent=5 // pred_region
        %s2238 = ssub.s32 %s18, 2
        // Predicated region
        $region57: #{tpu_custom_call.1} parent=55 // pred_check
          %p2239 = pneg %p94
        $region58: #{tpu_custom_call.1} parent=55 // pred_check_branch
          %2241 = sbr.rel (%p2239) target = $region60
        $region59: #{tpu_custom_call.1} parent=55 // pred_region
          %s2242 = sand.u32 %s79, 1
          %s2243 = scalar_lea.sflag [#allocation5], %s2242
          %s2244 = sand.u32 %s79, 1
          %s2245 = smul.addr %s2244, 256
          %s2246 = scalar_lea.vmem [#allocation8], %s2245
          %2247 = dma.done %s2243, 4096
        $region60: #{tpu_custom_call.1} parent=55 // pred_fallthru
          _
      $region56: #{tpu_custom_call.1} parent=5 // pred_fallthru
        _
    $region6: #{tpu_custom_call.1} parent=1 // loop_footer
      %s22 = sadd.s32 1, %s18
    $region7: #{tpu_custom_call.1} parent=1 // loop_footer_branch
      %17 = sbr.rel target = $region3
    $region8: #{tpu_custom_call.1} parent=1 // loop_exit
      _
    %2248 = vsyncpa [#allocation4], 1
    %s2249 = scalar_lea.sflag [#allocation4], 1
    %2250 = vsyncpa %s2249, 1
    %2251 = vsyncpa [#allocation7], 1
    %2252 = vsyncpa [#allocation5], 1
    %s2253 = scalar_lea.sflag [#allocation5], 1
    %2254 = vsyncpa %s2253, 1
    %2255 = vsyncpa [#allocation10], 1

</llo_original>
